<compile_context>
chip_gen: v7x
topology: tpu7x:2x2x1
jax: 0.10.0
libtpu: 0.0.40
codegen_flags: <defaults>
</compile_context>

<pallas_src>
import functools
import math

import jax
import jax.numpy as jnp
from jax.experimental import pallas as pl
from jax.experimental.pallas import tpu as pltpu

_NEG_BIG = -1e30  # padded-class bias: never wins the max, exp() underflows to 0


def _rnn_kernel(num_layers, input_size, hidden_size,
                x_ref, w_ref, head_ref, out_ref, act_ref):
    """Fused stacked tanh-RNN -> Linear -> LogSoftmax.

    x_ref    : (T, D_in)            f32  last batch row of the input
    w_ref    : (sum_l(D_l + H), H)  f32  [W_ih^T ; W_hh^T] stacked per layer
    head_ref : (H + L + 1, C_pad)   f32  rows [0, H)      = fc_w^T (pad cols 0)
                                         rows [H, H+L)    = b_ih + b_hh per layer
                                         row   H + L      = fc_b (pad = -1e30)
    out_ref  : (T, C_pad)           f32  log_softmax(logits)
    act_ref  : (T, H)               f32  scratch: per-layer hidden-state slab
    """
    H = hidden_size
    L = num_layers
    T = x_ref.shape[0]

    head = head_ref[...]                          # (H + L + 1, C_pad)
    fc_w_t = head[:H, :]                          # (H, C_pad)
    fc_b = head[H + L:H + L + 1, :]               # (1, C_pad)

    layer_inp = x_ref[...]                        # (T, D_in) f32
    row = 0
    for l in range(L):
        d_l = input_size if l == 0 else H
        w_ih_t = w_ref[row:row + d_l, :]          # (D_l, H)  static, 8-aligned rows
        row += d_l
        w_hh_t = w_ref[row:row + H, :]            # (H, H)
        row += H
        bias = head[H + l:H + l + 1, :H]          # (1, H)

        # Hoisted input projection: one (T, D_l) @ (D_l, H) matmul + one bias add.
        xproj = jnp.dot(layer_inp, w_ih_t,
                        preferred_element_type=jnp.float32) + bias      # (T, H)

        # Serial recurrence (the critical path).  h_0 == 0, so step 0 needs no
        # W_hh matmul; the remaining T-1 steps reuse the same loop-invariant RHS.
        h = jnp.tanh(xproj[0:1, :])
        act_ref[0:1, :] = h
        for t in range(1, T):                     # static unroll (T is small)
            pre = xproj[t:t + 1, :] + jnp.dot(h, w_hh_t,
                                              preferred_element_type=jnp.float32)
            h = jnp.tanh(pre)
            act_ref[t:t + 1, :] = h               # row store into lane-dense slab
        layer_inp = act_ref[...]                  # (T, H): next layer / classifier

    # Classifier over class-padded lanes (padded weight cols are 0, padded bias
    # is -1e30 so those lanes never affect max / sum).
    logits = jnp.dot(layer_inp, fc_w_t,
                     preferred_element_type=jnp.float32) + fc_b         # (T, C_pad)

    # log_softmax over the class dim (f32).
    m = jnp.max(logits, axis=-1, keepdims=True)
    z = logits - m
    lse = jnp.log(jnp.sum(jnp.exp(z), axis=-1, keepdims=True))
    out_ref[...] = z - lse


def pack_params(params, input_size, hidden_size, num_layers, num_classes):
    """One-time packing of PyTorch-layout params into 2 kernel slabs."""
    layer_params, (fc_w, fc_b) = params
    H = hidden_size
    c_pad = pl.cdiv(num_classes, 128) * 128

    w_rows = []
    bias_rows = []
    for (w_ih, w_hh, b_ih, b_hh) in layer_params:
        w_rows.append(jnp.transpose(w_ih).astype(jnp.float32))     # (D_l, H)
        w_rows.append(jnp.transpose(w_hh).astype(jnp.float32))     # (H, H)
        bias_rows.append(jnp.zeros((1, c_pad), jnp.float32)
                         .at[0, :H].set((b_ih + b_hh).astype(jnp.float32)))
    w_slab = jnp.concatenate(w_rows, axis=0)                       # (sum rows, H)

    fc_w_t_pad = (jnp.zeros((H, c_pad), jnp.float32)
                  .at[:, :num_classes].set(jnp.transpose(fc_w).astype(jnp.float32)))
    fc_b_pad = (jnp.full((1, c_pad), _NEG_BIG, jnp.float32)
                .at[0, :num_classes].set(fc_b.astype(jnp.float32)))
    head = jnp.concatenate([fc_w_t_pad] + bias_rows + [fc_b_pad], axis=0)
    return w_slab, head


@functools.partial(jax.jit, static_argnums=(3, 4, 5, 6))
def rnn_forward_packed(x, w_slab, head, input_size, hidden_size, num_layers,
                       num_classes):
    """Per-call path: x (B, T, D_in) f32 + pre-packed slabs -> (T, num_classes)."""
    x = x.astype(jnp.float32)
    _, T, _ = x.shape
    H = hidden_size
    c_pad = head.shape[1]

    # output[-1, :] (batch_first) only reads the LAST batch row, and the RNN
    # recurrence is independent per batch element -> drop the dead rows now.
    x_last = x[-1]                                          # (T, D_in)

    flops = 2 * T * H * c_pad
    d_l = input_size
    for _ in range(num_layers):
        flops += 2 * T * d_l * H + 2 * T * H * H
        d_l = H
    transcendentals = num_layers * T * H + T * c_pad + T     # tanh + exp + log
    bytes_accessed = 4 * (x_last.size + w_slab.size + head.size + T * c_pad)

    kernel = functools.partial(_rnn_kernel, num_layers, input_size, hidden_size)
    out_pad = pl.pallas_call(
        kernel,
        out_shape=jax.ShapeDtypeStruct((T, c_pad), jnp.float32),
        in_specs=[pl.BlockSpec(memory_space=pltpu.MemorySpace.VMEM)] * 3,
        out_specs=pl.BlockSpec(memory_space=pltpu.MemorySpace.VMEM),
        scratch_shapes=[pltpu.VMEM((T, H), jnp.float32)],
        cost_estimate=pl.CostEstimate(flops=flops,
                                      transcendentals=transcendentals,
                                      bytes_accessed=bytes_accessed),
    )(x_last, w_slab, head)
    return out_pad[:, :num_classes]


def rnn_forward(x, params, num_layers, num_classes):
    """Convenience wrapper (pack + call). Cache pack_params per parameter set."""
    layer_params, _ = params
    input_size = layer_params[0][0].shape[1]
    hidden_size = layer_params[0][1].shape[0]
    w_slab, head = pack_params(params, input_size, hidden_size, num_layers,
                               num_classes)
    return rnn_forward_packed(x, w_slab, head, input_size, hidden_size,
                              num_layers, num_classes)


def rnn_reference(x, params, num_layers, num_classes):
    """Pure-JAX f32 reference mirroring the PyTorch forward exactly."""
    layer_params, (fc_w, fc_b) = params
    x = x.astype(jnp.float32)
    B, T, _ = x.shape
    inp = x
    for (w_ih, w_hh, b_ih, b_hh) in layer_params:
        H = w_hh.shape[0]
        h = jnp.zeros((B, H), jnp.float32)
        outs = []
        for t in range(T):
            h = jnp.tanh(inp[:, t, :] @ w_ih.T + h @ w_hh.T + b_ih + b_hh)
            outs.append(h)
        inp = jnp.stack(outs, axis=1)                       # (B, T, H)
    last = inp[-1]                                          # output[-1, :] -> (T, H)
    logits = last @ fc_w.T + fc_b
    return jax.nn.log_softmax(logits, axis=-1)


def init_params(key, input_size, hidden_size, num_layers, num_classes):
    """PyTorch-style uniform(-1/sqrt(H), 1/sqrt(H)) init, PyTorch layouts."""
    k = 1.0 / math.sqrt(hidden_size)
    layer_params = []
    for l in range(num_layers):
        d_in = input_size if l == 0 else hidden_size
        key, k1, k2, k3, k4 = jax.random.split(key, 5)
        w_ih = jax.random.uniform(k1, (hidden_size, d_in), jnp.float32, -k, k)
        w_hh = jax.random.uniform(k2, (hidden_size, hidden_size), jnp.float32, -k, k)
        b_ih = jax.random.uniform(k3, (hidden_size,), jnp.float32, -k, k)
        b_hh = jax.random.uniform(k4, (hidden_size,), jnp.float32, -k, k)
        layer_params.append((w_ih, w_hh, b_ih, b_hh))
    key, k5, k6 = jax.random.split(key, 3)
    fc_w = jax.random.uniform(k5, (num_classes, hidden_size), jnp.float32, -k, k)
    fc_b = jax.random.uniform(k6, (num_classes,), jnp.float32, -k, k)
    return layer_params, (fc_w, fc_b)


if __name__ == "__main__":
    input_size = 16
    hidden_size = 32
    num_layers = 2
    num_classes = 10
    batch_size = 2
    seq_len = 8

    key = jax.random.PRNGKey(0)
    key, kx, kp = jax.random.split(key, 3)
    x = jax.random.normal(kx, (batch_size, seq_len, input_size), jnp.float32)
    params = init_params(kp, input_size, hidden_size, num_layers, num_classes)

    # Pack once (per parameter set), then the per-call path is just the kernel.
    w_slab, head = pack_params(params, input_size, hidden_size, num_layers,
                               num_classes)
    w_slab = jax.block_until_ready(w_slab)
    head = jax.block_until_ready(head)

    out = rnn_forward_packed(x, w_slab, head, input_size, hidden_size,
                             num_layers, num_classes)
    out = jax.block_until_ready(out)

    assert out.shape == (seq_len, num_classes), out.shape
    # log_softmax rows should sum (in prob space) to ~1
    assert jnp.allclose(jnp.sum(jnp.exp(out), axis=-1), 1.0, atol=1e-4)
    # f32 end-to-end -> tight parity with the PyTorch-equivalent reference
    ref = rnn_reference(x, params, num_layers, num_classes)
    assert jnp.allclose(out, ref, atol=1e-4), float(jnp.max(jnp.abs(out - ref)))
    print("KERNEL_OK")
</pallas_src>

<mosaic_0001>
module attributes {stable_mosaic.version = 11 : i64} {
  func.func @_rnn_kernel(%arg0: memref<8x16xf32, #tpu.memory_space<vmem>>, %arg1: memref<112x32xf32, #tpu.memory_space<vmem>>, %arg2: memref<35x128xf32, #tpu.memory_space<vmem>>, %arg3: memref<8x128xf32, #tpu.memory_space<vmem>>, %arg4: memref<8x32xf32, #tpu.memory_space<vmem>>) attributes {dimension_semantics = [], scalar_prefetch = 0 : i64, scratch_operands = 1 : i64, tpu.core_type = #tpu.core_type<tc>} {
    %c0 = arith.constant 0 : index
    %c0_0 = arith.constant 0 : index
    %0 = vector.load %arg2[%c0, %c0_0] : memref<35x128xf32, #tpu.memory_space<vmem>>, vector<35x128xf32>
    %1 = vector.extract_strided_slice %0 {offsets = [0, 0], sizes = [32, 128], strides = [1, 1]} : vector<35x128xf32> to vector<32x128xf32>
    %2 = vector.extract_strided_slice %0 {offsets = [34, 0], sizes = [1, 128], strides = [1, 1]} : vector<35x128xf32> to vector<1x128xf32>
    %c0_1 = arith.constant 0 : index
    %c0_2 = arith.constant 0 : index
    %3 = vector.load %arg0[%c0_1, %c0_2] : memref<8x16xf32, #tpu.memory_space<vmem>>, vector<8x16xf32>
    %c0_3 = arith.constant 0 : index
    %c0_4 = arith.constant 0 : index
    %4 = vector.load %arg1[%c0_3, %c0_4] : memref<112x32xf32, #tpu.memory_space<vmem>>, vector<16x32xf32>
    %c16 = arith.constant 16 : index
    %c0_5 = arith.constant 0 : index
    %5 = vector.load %arg1[%c16, %c0_5] : memref<112x32xf32, #tpu.memory_space<vmem>>, vector<32x32xf32>
    %6 = vector.extract_strided_slice %0 {offsets = [32, 0], sizes = [1, 32], strides = [1, 1]} : vector<35x128xf32> to vector<1x32xf32>
    %cst = arith.constant dense<0.000000e+00> : vector<8x32xf32>
    %7 = tpu.matmul %3, %4, %cst {dimension_numbers = #tpu.dot_dimension_numbers<[1], [0], [0], [1], [0, 0, 1, 1], [], []>} : vector<8x16xf32>, vector<16x32xf32>, vector<8x32xf32> -> vector<8x32xf32>
    %8 = vector.broadcast %6 : vector<1x32xf32> to vector<8x32xf32>
    %9 = arith.addf %7, %8 : vector<8x32xf32>
    %10 = vector.extract_strided_slice %9 {offsets = [0, 0], sizes = [1, 32], strides = [1, 1]} : vector<8x32xf32> to vector<1x32xf32>
    %11 = math.tanh %10 : vector<1x32xf32>
    %c0_6 = arith.constant 0 : index
    %c0_7 = arith.constant 0 : index
    %12 = vector.load %arg4[%c0_6, %c0_7] : memref<8x32xf32, #tpu.memory_space<vmem>>, vector<1x32xf32>
    tpu.vector_store %arg4[%c0_6, %c0_7], %11 {strides = array<i32>} : memref<8x32xf32, #tpu.memory_space<vmem>>, vector<1x32xf32>,
    %13 = vector.extract_strided_slice %9 {offsets = [1, 0], sizes = [1, 32], strides = [1, 1]} : vector<8x32xf32> to vector<1x32xf32>
    %cst_8 = arith.constant dense<0.000000e+00> : vector<1x32xf32>
    %14 = tpu.matmul %11, %5, %cst_8 {dimension_numbers = #tpu.dot_dimension_numbers<[1], [0], [0], [1], [0, 0, 1, 1], [], []>} : vector<1x32xf32>, vector<32x32xf32>, vector<1x32xf32> -> vector<1x32xf32>
    %15 = arith.addf %13, %14 : vector<1x32xf32>
    %16 = math.tanh %15 : vector<1x32xf32>
    %c1 = arith.constant 1 : index
    %c0_9 = arith.constant 0 : index
    %17 = vector.load %arg4[%c1, %c0_9] : memref<8x32xf32, #tpu.memory_space<vmem>>, vector<1x32xf32>
    tpu.vector_store %arg4[%c1, %c0_9], %16 {strides = array<i32>} : memref<8x32xf32, #tpu.memory_space<vmem>>, vector<1x32xf32>,
    %18 = vector.extract_strided_slice %9 {offsets = [2, 0], sizes = [1, 32], strides = [1, 1]} : vector<8x32xf32> to vector<1x32xf32>
    %cst_10 = arith.constant dense<0.000000e+00> : vector<1x32xf32>
    %19 = tpu.matmul %16, %5, %cst_10 {dimension_numbers = #tpu.dot_dimension_numbers<[1], [0], [0], [1], [0, 0, 1, 1], [], []>} : vector<1x32xf32>, vector<32x32xf32>, vector<1x32xf32> -> vector<1x32xf32>
    %20 = arith.addf %18, %19 : vector<1x32xf32>
    %21 = math.tanh %20 : vector<1x32xf32>
    %c2 = arith.constant 2 : index
    %c0_11 = arith.constant 0 : index
    %22 = vector.load %arg4[%c2, %c0_11] : memref<8x32xf32, #tpu.memory_space<vmem>>, vector<1x32xf32>
    tpu.vector_store %arg4[%c2, %c0_11], %21 {strides = array<i32>} : memref<8x32xf32, #tpu.memory_space<vmem>>, vector<1x32xf32>,
    %23 = vector.extract_strided_slice %9 {offsets = [3, 0], sizes = [1, 32], strides = [1, 1]} : vector<8x32xf32> to vector<1x32xf32>
    %cst_12 = arith.constant dense<0.000000e+00> : vector<1x32xf32>
    %24 = tpu.matmul %21, %5, %cst_12 {dimension_numbers = #tpu.dot_dimension_numbers<[1], [0], [0], [1], [0, 0, 1, 1], [], []>} : vector<1x32xf32>, vector<32x32xf32>, vector<1x32xf32> -> vector<1x32xf32>
    %25 = arith.addf %23, %24 : vector<1x32xf32>
    %26 = math.tanh %25 : vector<1x32xf32>
    %c3 = arith.constant 3 : index
    %c0_13 = arith.constant 0 : index
    %27 = vector.load %arg4[%c3, %c0_13] : memref<8x32xf32, #tpu.memory_space<vmem>>, vector<1x32xf32>
    tpu.vector_store %arg4[%c3, %c0_13], %26 {strides = array<i32>} : memref<8x32xf32, #tpu.memory_space<vmem>>, vector<1x32xf32>,
    %28 = vector.extract_strided_slice %9 {offsets = [4, 0], sizes = [1, 32], strides = [1, 1]} : vector<8x32xf32> to vector<1x32xf32>
    %cst_14 = arith.constant dense<0.000000e+00> : vector<1x32xf32>
    %29 = tpu.matmul %26, %5, %cst_14 {dimension_numbers = #tpu.dot_dimension_numbers<[1], [0], [0], [1], [0, 0, 1, 1], [], []>} : vector<1x32xf32>, vector<32x32xf32>, vector<1x32xf32> -> vector<1x32xf32>
    %30 = arith.addf %28, %29 : vector<1x32xf32>
    %31 = math.tanh %30 : vector<1x32xf32>
    %c4 = arith.constant 4 : index
    %c0_15 = arith.constant 0 : index
    %32 = vector.load %arg4[%c4, %c0_15] : memref<8x32xf32, #tpu.memory_space<vmem>>, vector<1x32xf32>
    tpu.vector_store %arg4[%c4, %c0_15], %31 {strides = array<i32>} : memref<8x32xf32, #tpu.memory_space<vmem>>, vector<1x32xf32>,
    %33 = vector.extract_strided_slice %9 {offsets = [5, 0], sizes = [1, 32], strides = [1, 1]} : vector<8x32xf32> to vector<1x32xf32>
    %cst_16 = arith.constant dense<0.000000e+00> : vector<1x32xf32>
    %34 = tpu.matmul %31, %5, %cst_16 {dimension_numbers = #tpu.dot_dimension_numbers<[1], [0], [0], [1], [0, 0, 1, 1], [], []>} : vector<1x32xf32>, vector<32x32xf32>, vector<1x32xf32> -> vector<1x32xf32>
    %35 = arith.addf %33, %34 : vector<1x32xf32>
    %36 = math.tanh %35 : vector<1x32xf32>
    %c5 = arith.constant 5 : index
    %c0_17 = arith.constant 0 : index
    %37 = vector.load %arg4[%c5, %c0_17] : memref<8x32xf32, #tpu.memory_space<vmem>>, vector<1x32xf32>
    tpu.vector_store %arg4[%c5, %c0_17], %36 {strides = array<i32>} : memref<8x32xf32, #tpu.memory_space<vmem>>, vector<1x32xf32>,
    %38 = vector.extract_strided_slice %9 {offsets = [6, 0], sizes = [1, 32], strides = [1, 1]} : vector<8x32xf32> to vector<1x32xf32>
    %cst_18 = arith.constant dense<0.000000e+00> : vector<1x32xf32>
    %39 = tpu.matmul %36, %5, %cst_18 {dimension_numbers = #tpu.dot_dimension_numbers<[1], [0], [0], [1], [0, 0, 1, 1], [], []>} : vector<1x32xf32>, vector<32x32xf32>, vector<1x32xf32> -> vector<1x32xf32>
    %40 = arith.addf %38, %39 : vector<1x32xf32>
    %41 = math.tanh %40 : vector<1x32xf32>
    %c6 = arith.constant 6 : index
    %c0_19 = arith.constant 0 : index
    %42 = vector.load %arg4[%c6, %c0_19] : memref<8x32xf32, #tpu.memory_space<vmem>>, vector<1x32xf32>
    tpu.vector_store %arg4[%c6, %c0_19], %41 {strides = array<i32>} : memref<8x32xf32, #tpu.memory_space<vmem>>, vector<1x32xf32>,
    %43 = vector.extract_strided_slice %9 {offsets = [7, 0], sizes = [1, 32], strides = [1, 1]} : vector<8x32xf32> to vector<1x32xf32>
    %cst_20 = arith.constant dense<0.000000e+00> : vector<1x32xf32>
    %44 = tpu.matmul %41, %5, %cst_20 {dimension_numbers = #tpu.dot_dimension_numbers<[1], [0], [0], [1], [0, 0, 1, 1], [], []>} : vector<1x32xf32>, vector<32x32xf32>, vector<1x32xf32> -> vector<1x32xf32>
    %45 = arith.addf %43, %44 : vector<1x32xf32>
    %46 = math.tanh %45 : vector<1x32xf32>
    %c7 = arith.constant 7 : index
    %c0_21 = arith.constant 0 : index
    %47 = vector.load %arg4[%c7, %c0_21] : memref<8x32xf32, #tpu.memory_space<vmem>>, vector<1x32xf32>
    tpu.vector_store %arg4[%c7, %c0_21], %46 {strides = array<i32>} : memref<8x32xf32, #tpu.memory_space<vmem>>, vector<1x32xf32>,
    %c0_22 = arith.constant 0 : index
    %c0_23 = arith.constant 0 : index
    %48 = vector.load %arg4[%c0_22, %c0_23] : memref<8x32xf32, #tpu.memory_space<vmem>>, vector<8x32xf32>
    %c48 = arith.constant 48 : index
    %c0_24 = arith.constant 0 : index
    %49 = vector.load %arg1[%c48, %c0_24] : memref<112x32xf32, #tpu.memory_space<vmem>>, vector<32x32xf32>
    %c80 = arith.constant 80 : index
    %c0_25 = arith.constant 0 : index
    %50 = vector.load %arg1[%c80, %c0_25] : memref<112x32xf32, #tpu.memory_space<vmem>>, vector<32x32xf32>
    %51 = vector.extract_strided_slice %0 {offsets = [33, 0], sizes = [1, 32], strides = [1, 1]} : vector<35x128xf32> to vector<1x32xf32>
    %cst_26 = arith.constant dense<0.000000e+00> : vector<8x32xf32>
    %52 = tpu.matmul %48, %49, %cst_26 {dimension_numbers = #tpu.dot_dimension_numbers<[1], [0], [0], [1], [0, 0, 1, 1], [], []>} : vector<8x32xf32>, vector<32x32xf32>, vector<8x32xf32> -> vector<8x32xf32>
    %53 = vector.broadcast %51 : vector<1x32xf32> to vector<8x32xf32>
    %54 = arith.addf %52, %53 : vector<8x32xf32>
    %55 = vector.extract_strided_slice %54 {offsets = [0, 0], sizes = [1, 32], strides = [1, 1]} : vector<8x32xf32> to vector<1x32xf32>
    %56 = math.tanh %55 : vector<1x32xf32>
    %c0_27 = arith.constant 0 : index
    %c0_28 = arith.constant 0 : index
    %57 = vector.load %arg4[%c0_27, %c0_28] : memref<8x32xf32, #tpu.memory_space<vmem>>, vector<1x32xf32>
    tpu.vector_store %arg4[%c0_27, %c0_28], %56 {strides = array<i32>} : memref<8x32xf32, #tpu.memory_space<vmem>>, vector<1x32xf32>,
    %58 = vector.extract_strided_slice %54 {offsets = [1, 0], sizes = [1, 32], strides = [1, 1]} : vector<8x32xf32> to vector<1x32xf32>
    %cst_29 = arith.constant dense<0.000000e+00> : vector<1x32xf32>
    %59 = tpu.matmul %56, %50, %cst_29 {dimension_numbers = #tpu.dot_dimension_numbers<[1], [0], [0], [1], [0, 0, 1, 1], [], []>} : vector<1x32xf32>, vector<32x32xf32>, vector<1x32xf32> -> vector<1x32xf32>
    %60 = arith.addf %58, %59 : vector<1x32xf32>
    %61 = math.tanh %60 : vector<1x32xf32>
    %c1_30 = arith.constant 1 : index
    %c0_31 = arith.constant 0 : index
    %62 = vector.load %arg4[%c1_30, %c0_31] : memref<8x32xf32, #tpu.memory_space<vmem>>, vector<1x32xf32>
    tpu.vector_store %arg4[%c1_30, %c0_31], %61 {strides = array<i32>} : memref<8x32xf32, #tpu.memory_space<vmem>>, vector<1x32xf32>,
    %63 = vector.extract_strided_slice %54 {offsets = [2, 0], sizes = [1, 32], strides = [1, 1]} : vector<8x32xf32> to vector<1x32xf32>
    %cst_32 = arith.constant dense<0.000000e+00> : vector<1x32xf32>
    %64 = tpu.matmul %61, %50, %cst_32 {dimension_numbers = #tpu.dot_dimension_numbers<[1], [0], [0], [1], [0, 0, 1, 1], [], []>} : vector<1x32xf32>, vector<32x32xf32>, vector<1x32xf32> -> vector<1x32xf32>
    %65 = arith.addf %63, %64 : vector<1x32xf32>
    %66 = math.tanh %65 : vector<1x32xf32>
    %c2_33 = arith.constant 2 : index
    %c0_34 = arith.constant 0 : index
    %67 = vector.load %arg4[%c2_33, %c0_34] : memref<8x32xf32, #tpu.memory_space<vmem>>, vector<1x32xf32>
    tpu.vector_store %arg4[%c2_33, %c0_34], %66 {strides = array<i32>} : memref<8x32xf32, #tpu.memory_space<vmem>>, vector<1x32xf32>,
    %68 = vector.extract_strided_slice %54 {offsets = [3, 0], sizes = [1, 32], strides = [1, 1]} : vector<8x32xf32> to vector<1x32xf32>
    %cst_35 = arith.constant dense<0.000000e+00> : vector<1x32xf32>
    %69 = tpu.matmul %66, %50, %cst_35 {dimension_numbers = #tpu.dot_dimension_numbers<[1], [0], [0], [1], [0, 0, 1, 1], [], []>} : vector<1x32xf32>, vector<32x32xf32>, vector<1x32xf32> -> vector<1x32xf32>
    %70 = arith.addf %68, %69 : vector<1x32xf32>
    %71 = math.tanh %70 : vector<1x32xf32>
    %c3_36 = arith.constant 3 : index
    %c0_37 = arith.constant 0 : index
    %72 = vector.load %arg4[%c3_36, %c0_37] : memref<8x32xf32, #tpu.memory_space<vmem>>, vector<1x32xf32>
    tpu.vector_store %arg4[%c3_36, %c0_37], %71 {strides = array<i32>} : memref<8x32xf32, #tpu.memory_space<vmem>>, vector<1x32xf32>,
    %73 = vector.extract_strided_slice %54 {offsets = [4, 0], sizes = [1, 32], strides = [1, 1]} : vector<8x32xf32> to vector<1x32xf32>
    %cst_38 = arith.constant dense<0.000000e+00> : vector<1x32xf32>
    %74 = tpu.matmul %71, %50, %cst_38 {dimension_numbers = #tpu.dot_dimension_numbers<[1], [0], [0], [1], [0, 0, 1, 1], [], []>} : vector<1x32xf32>, vector<32x32xf32>, vector<1x32xf32> -> vector<1x32xf32>
    %75 = arith.addf %73, %74 : vector<1x32xf32>
    %76 = math.tanh %75 : vector<1x32xf32>
    %c4_39 = arith.constant 4 : index
    %c0_40 = arith.constant 0 : index
    %77 = vector.load %arg4[%c4_39, %c0_40] : memref<8x32xf32, #tpu.memory_space<vmem>>, vector<1x32xf32>
    tpu.vector_store %arg4[%c4_39, %c0_40], %76 {strides = array<i32>} : memref<8x32xf32, #tpu.memory_space<vmem>>, vector<1x32xf32>,
    %78 = vector.extract_strided_slice %54 {offsets = [5, 0], sizes = [1, 32], strides = [1, 1]} : vector<8x32xf32> to vector<1x32xf32>
    %cst_41 = arith.constant dense<0.000000e+00> : vector<1x32xf32>
    %79 = tpu.matmul %76, %50, %cst_41 {dimension_numbers = #tpu.dot_dimension_numbers<[1], [0], [0], [1], [0, 0, 1, 1], [], []>} : vector<1x32xf32>, vector<32x32xf32>, vector<1x32xf32> -> vector<1x32xf32>
    %80 = arith.addf %78, %79 : vector<1x32xf32>
    %81 = math.tanh %80 : vector<1x32xf32>
    %c5_42 = arith.constant 5 : index
    %c0_43 = arith.constant 0 : index
    %82 = vector.load %arg4[%c5_42, %c0_43] : memref<8x32xf32, #tpu.memory_space<vmem>>, vector<1x32xf32>
    tpu.vector_store %arg4[%c5_42, %c0_43], %81 {strides = array<i32>} : memref<8x32xf32, #tpu.memory_space<vmem>>, vector<1x32xf32>,
    %83 = vector.extract_strided_slice %54 {offsets = [6, 0], sizes = [1, 32], strides = [1, 1]} : vector<8x32xf32> to vector<1x32xf32>
    %cst_44 = arith.constant dense<0.000000e+00> : vector<1x32xf32>
    %84 = tpu.matmul %81, %50, %cst_44 {dimension_numbers = #tpu.dot_dimension_numbers<[1], [0], [0], [1], [0, 0, 1, 1], [], []>} : vector<1x32xf32>, vector<32x32xf32>, vector<1x32xf32> -> vector<1x32xf32>
    %85 = arith.addf %83, %84 : vector<1x32xf32>
    %86 = math.tanh %85 : vector<1x32xf32>
    %c6_45 = arith.constant 6 : index
    %c0_46 = arith.constant 0 : index
    %87 = vector.load %arg4[%c6_45, %c0_46] : memref<8x32xf32, #tpu.memory_space<vmem>>, vector<1x32xf32>
    tpu.vector_store %arg4[%c6_45, %c0_46], %86 {strides = array<i32>} : memref<8x32xf32, #tpu.memory_space<vmem>>, vector<1x32xf32>,
    %88 = vector.extract_strided_slice %54 {offsets = [7, 0], sizes = [1, 32], strides = [1, 1]} : vector<8x32xf32> to vector<1x32xf32>
    %cst_47 = arith.constant dense<0.000000e+00> : vector<1x32xf32>
    %89 = tpu.matmul %86, %50, %cst_47 {dimension_numbers = #tpu.dot_dimension_numbers<[1], [0], [0], [1], [0, 0, 1, 1], [], []>} : vector<1x32xf32>, vector<32x32xf32>, vector<1x32xf32> -> vector<1x32xf32>
    %90 = arith.addf %88, %89 : vector<1x32xf32>
    %91 = math.tanh %90 : vector<1x32xf32>
    %c7_48 = arith.constant 7 : index
    %c0_49 = arith.constant 0 : index
    %92 = vector.load %arg4[%c7_48, %c0_49] : memref<8x32xf32, #tpu.memory_space<vmem>>, vector<1x32xf32>
    tpu.vector_store %arg4[%c7_48, %c0_49], %91 {strides = array<i32>} : memref<8x32xf32, #tpu.memory_space<vmem>>, vector<1x32xf32>,
    %c0_50 = arith.constant 0 : index
    %c0_51 = arith.constant 0 : index
    %93 = vector.load %arg4[%c0_50, %c0_51] : memref<8x32xf32, #tpu.memory_space<vmem>>, vector<8x32xf32>
    %cst_52 = arith.constant dense<0.000000e+00> : vector<8x128xf32>
    %94 = tpu.matmul %93, %1, %cst_52 {dimension_numbers = #tpu.dot_dimension_numbers<[1], [0], [0], [1], [0, 0, 1, 1], [], []>} : vector<8x32xf32>, vector<32x128xf32>, vector<8x128xf32> -> vector<8x128xf32>
    %95 = vector.broadcast %2 : vector<1x128xf32> to vector<8x128xf32>
    %96 = arith.addf %94, %95 : vector<8x128xf32>
    %cst_53 = arith.constant dense<0xFF800000> : vector<8xf32>
    %97 = vector.multi_reduction <maximumf>, %96, %cst_53 [1] : vector<8x128xf32> to vector<8xf32>
    %98 = vector.shape_cast %97 : vector<8xf32> to vector<8x1xf32>
    %99 = vector.broadcast %98 : vector<8x1xf32> to vector<8x128xf32>
    %100 = arith.subf %96, %99 : vector<8x128xf32>
    %101 = math.exp %100 : vector<8x128xf32>
    %cst_54 = arith.constant dense<0.000000e+00> : vector<8xf32>
    %102 = vector.multi_reduction <add>, %101, %cst_54 [1] : vector<8x128xf32> to vector<8xf32>
    %103 = vector.shape_cast %102 : vector<8xf32> to vector<8x1xf32>
    %104 = math.log %103 : vector<8x1xf32>
    %105 = vector.broadcast %104 : vector<8x1xf32> to vector<8x128xf32>
    %106 = arith.subf %100, %105 : vector<8x128xf32>
    %c0_55 = arith.constant 0 : index
    %c0_56 = arith.constant 0 : index
    %107 = vector.load %arg3[%c0_55, %c0_56] : memref<8x128xf32, #tpu.memory_space<vmem>>, vector<8x128xf32>
    tpu.vector_store %arg3[%c0_55, %c0_56], %106 {strides = array<i32>} : memref<8x128xf32, #tpu.memory_space<vmem>>, vector<8x128xf32>,
    return
  }
}

</mosaic_0001>

<llo_original>
// kernel: rnn_forward_packed.1
$region0: #{rnn_forward_packed.1}
  #allocation0 [shape = 'u32[]', space=smem, size = 0x4, offset = 0x4, fixed_abs, tag = 'smem constant byte address 0x4 - core index']
  #allocation1 [shape = 'u32[144,128]{1,0:T(1,128)}', space=vmem, size = 0x12000, scoped, tag = 'internal scratch']
  #allocation2 [shape = 'f32[8,32]{1,0:T(8,128)}', space=vmem, size = 0x1000, scoped, tag = 'scratch operand']
  %s0 = inlined_call_operand.vmem [shape: f32[8,16], index: 0, kind: input, shape index: {}]
  %s1 = inlined_call_operand.vmem [shape: f32[112,32], index: 1, kind: input, shape index: {}]
  %s2 = inlined_call_operand.vmem [shape: f32[35,128], index: 2, kind: input, shape index: {}]
  %s3 = inlined_call_operand.hbm [shape: f32[8,128], index: 3, kind: output, shape index: {}]
  %s4 = sld [smem:[#allocation0]]
  $region22: #{rnn_forward_packed.1} parent=0
    _
  %s6 = ssub.s32 1, %s4
  %s7 = scalar_select 0, %s6, %s4
  $region1: #{rnn_forward_packed.1} parent=0
    #allocation3 [shape = 'u8[4096]{0}', space=vmem, size = 0x1000, scoped, tag = 'output window, operand 0, single buffered']
    #allocation4 [shape = 's32[1]{0}', space=sflag, size = 0x4, scoped, tag = 'scoped memory for rnn_forward_packed.1']
    %8 = vsyncpa [#allocation4], 0
    // Predicated region
    $region2: #{rnn_forward_packed.1} parent=1 // pred_check
      _
    $region3: #{rnn_forward_packed.1} parent=1 // pred_check_branch
      %10 = sbr.rel (0) target = $region5
    $region4: #{rnn_forward_packed.1} parent=1 // pred_region
      _
    $region5: #{rnn_forward_packed.1} parent=1 // pred_fallthru
      _
    // Predicated region
    $region6: #{rnn_forward_packed.1} parent=1 // pred_check
      _
    $region7: #{rnn_forward_packed.1} parent=1 // pred_check_branch
      %12 = sbr.rel (0) target = $region9
    $region8: #{rnn_forward_packed.1} parent=1 // pred_region
      _
    $region9: #{rnn_forward_packed.1} parent=1 // pred_fallthru
      _
    // Predicated region
    $region10: #{rnn_forward_packed.1} parent=1 // pred_check
      _
    $region11: #{rnn_forward_packed.1} parent=1 // pred_check_branch
      %14 = sbr.rel (0) target = $region13
    $region12: #{rnn_forward_packed.1} parent=1 // pred_region
      _
    $region13: #{rnn_forward_packed.1} parent=1 // pred_fallthru
      _
    %v15 = vld [vmem:[%s2] sm:$0xff]
    %v16 = vld [vmem:[%s2 + $0x8] sm:$0xff]
    %v17 = vld [vmem:[%s2 + $0x10] sm:$0xff]
    %v18 = vld [vmem:[%s2 + $0x18] sm:$0xff]
    %v19 = vld [vmem:[%s2 + $0x20] sm:$0x7]
    %v20 = vld [vmem:[%s0] sm:$0xff]
    %v21 = vld [vmem:[%s1] sm:$0xff]
    %v22 = vld [vmem:[%s1 + $0x8] sm:$0xff]
    %v23 = vld [vmem:[%s1 + $0x10] sm:$0xff]
    %v24 = vld [vmem:[%s1 + $0x18] sm:$0xff]
    %v25 = vld [vmem:[%s1 + $0x20] sm:$0xff]
    %v26 = vld [vmem:[%s1 + $0x28] sm:$0xff]
    %v27 = vlaneseq
    %v28 = vshrl.u32 %v27, 7
    %v29 = vsub.s32 0, %v28
    %v30 = vrot.slane %v19, %v29
    %vm31 = vcmask 130048
    %v33 = vsel %vm31, %v20, 0
    %35 = vmatprep.subr.mxu0 0.0
    %36 = vmatpush1.msra.mxu0 %v21
    %37 = vmatprep.subr.mxu0 0.0
    %38 = vmatpush1.msra.mxu0 %v22
    %39 = vmatprep.subr.mxu0 0.0
    %40 = vmatpush1.msra.mxu0 0.0
    %41 = vmatprep.subr.mxu0 0.0
    %42 = vmatpush1.msra.mxu0 0.0
    %43 = vmatprep.subr.mxu0 0.0
    %44 = vmatpush1.msra.mxu0 0.0
    %45 = vmatprep.subr.mxu0 0.0
    %46 = vmatpush1.msra.mxu0 0.0
    %47 = vmatprep.subr.mxu0 0.0
    %48 = vmatpush1.msra.mxu0 0.0
    %49 = vmatprep.subr.mxu0 0.0
    %50 = vmatpush1.msra.mxu0 0.0
    %51 = vmatprep.subr.mxu0 0.0
    %52 = vmatpush1.msra.mxu0 0.0
    %53 = vmatprep.subr.mxu0 0.0
    %54 = vmatpush1.msra.mxu0 0.0
    %55 = vmatprep.subr.mxu0 0.0
    %56 = vmatpush1.msra.mxu0 0.0
    %57 = vmatprep.subr.mxu0 0.0
    %58 = vmatpush1.msra.mxu0 0.0
    %59 = vmatprep.subr.mxu0 0.0
    %60 = vmatpush1.msra.mxu0 0.0
    %61 = vmatprep.subr.mxu0 0.0
    %62 = vmatpush1.msra.mxu0 0.0
    %63 = vmatprep.subr.mxu0 0.0
    %64 = vmatpush1.msra.mxu0 0.0
    %65 = vmatprep.subr.mxu0 0.0
    %66 = vmatpush1.msra.mxu0 0.0
    %67 = vmatprep.subr.mxu0 0.0
    %68 = vmatpush1.msra.mxu0 0.0
    %69 = vmatprep.subr.mxu0 0.0
    %70 = vmatpush1.msra.mxu0 0.0
    %71 = vmatprep.subr.mxu0 0.0
    %72 = vmatpush1.msra.mxu0 0.0
    %73 = vmatprep.subr.mxu0 0.0
    %74 = vmatpush1.msra.mxu0 0.0
    %75 = vmatprep.subr.mxu0 0.0
    %76 = vmatpush1.msra.mxu0 0.0
    %77 = vmatprep.subr.mxu0 0.0
    %78 = vmatpush1.msra.mxu0 0.0
    %79 = vmatprep.subr.mxu0 0.0
    %80 = vmatpush1.msra.mxu0 0.0
    %81 = vmatprep.subr.mxu0 0.0
    %82 = vmatpush1.msra.mxu0 0.0
    %83 = vmatprep.subr.mxu0 0.0
    %84 = vmatpush1.msra.mxu0 0.0
    %85 = vmatprep.subr.mxu0 0.0
    %86 = vmatpush1.msra.mxu0 0.0
    %87 = vmatprep.subr.mxu0 0.0
    %88 = vmatpush1.msra.mxu0 0.0
    %89 = vmatprep.subr.mxu0 0.0
    %90 = vmatpush1.msra.mxu0 0.0
    %91 = vmatprep.subr.mxu0 0.0
    %92 = vmatpush1.msra.mxu0 0.0
    %93 = vmatprep.subr.mxu0 0.0
    %94 = vmatpush1.msra.mxu0 0.0
    %95 = vmatprep.subr.mxu0 0.0
    %96 = vmatpush1.msra.mxu0 0.0
    %97 = vmatprep.subr.mxu0 0.0
    %98 = vmatpush1.msra.mxu0 0.0
    %99 = vmatprep.mubr.f32.mxu0 0.0
    %100 = vmatmul.mubr.f32.gmra.mrb[0].mxu0 %v33
    %v101 = vpop.f32.mrb[0].mxu0
    %v102 = vadd.f32 %v30, %v101
    %v103 = vpop.f32.mrb[0].mxu0
    %104 = vdwg.mxu0
    %v105 = vtanh.pop %v102
    %vm106 = vcmask 253952
    %107 = vst.msk [vmem:[#allocation2] sm:$0x1] %vm106, %v105
    %vm108 = vcmask 261120
    %v110 = vsel %vm108, %v105, 0
    %112 = vmatprep.subr.mxu0 0.0
    %113 = vmatpush1.msra.mxu0 %v23
    %114 = vmatprep.subr.mxu0 0.0
    %115 = vmatpush1.msra.mxu0 %v24
    %116 = vmatprep.subr.mxu0 0.0
    %117 = vmatpush1.msra.mxu0 %v25
    %118 = vmatprep.subr.mxu0 0.0
    %119 = vmatpush1.msra.mxu0 %v26
    %120 = vmatprep.subr.mxu0 0.0
    %121 = vmatpush1.msra.mxu0 0.0
    %122 = vmatprep.subr.mxu0 0.0
    %123 = vmatpush1.msra.mxu0 0.0
    %124 = vmatprep.subr.mxu0 0.0
    %125 = vmatpush1.msra.mxu0 0.0
    %126 = vmatprep.subr.mxu0 0.0
    %127 = vmatpush1.msra.mxu0 0.0
    %128 = vmatprep.subr.mxu0 0.0
    %129 = vmatpush1.msra.mxu0 0.0
    %130 = vmatprep.subr.mxu0 0.0
    %131 = vmatpush1.msra.mxu0 0.0
    %132 = vmatprep.subr.mxu0 0.0
    %133 = vmatpush1.msra.mxu0 0.0
    %134 = vmatprep.subr.mxu0 0.0
    %135 = vmatpush1.msra.mxu0 0.0
    %136 = vmatprep.subr.mxu0 0.0
    %137 = vmatpush1.msra.mxu0 0.0
    %138 = vmatprep.subr.mxu0 0.0
    %139 = vmatpush1.msra.mxu0 0.0
    %140 = vmatprep.subr.mxu0 0.0
    %141 = vmatpush1.msra.mxu0 0.0
    %142 = vmatprep.subr.mxu0 0.0
    %143 = vmatpush1.msra.mxu0 0.0
    %144 = vmatprep.subr.mxu0 0.0
    %145 = vmatpush1.msra.mxu0 0.0
    %146 = vmatprep.subr.mxu0 0.0
    %147 = vmatpush1.msra.mxu0 0.0
    %148 = vmatprep.subr.mxu0 0.0
    %149 = vmatpush1.msra.mxu0 0.0
    %150 = vmatprep.subr.mxu0 0.0
    %151 = vmatpush1.msra.mxu0 0.0
    %152 = vmatprep.subr.mxu0 0.0
    %153 = vmatpush1.msra.mxu0 0.0
    %154 = vmatprep.subr.mxu0 0.0
    %155 = vmatpush1.msra.mxu0 0.0
    %156 = vmatprep.subr.mxu0 0.0
    %157 = vmatpush1.msra.mxu0 0.0
    %158 = vmatprep.subr.mxu0 0.0
    %159 = vmatpush1.msra.mxu0 0.0
    %160 = vmatprep.subr.mxu0 0.0
    %161 = vmatpush1.msra.mxu0 0.0
    %162 = vmatprep.subr.mxu0 0.0
    %163 = vmatpush1.msra.mxu0 0.0
    %164 = vmatprep.subr.mxu0 0.0
    %165 = vmatpush1.msra.mxu0 0.0
    %166 = vmatprep.subr.mxu0 0.0
    %167 = vmatpush1.msra.mxu0 0.0
    %168 = vmatprep.subr.mxu0 0.0
    %169 = vmatpush1.msra.mxu0 0.0
    %170 = vmatprep.subr.mxu0 0.0
    %171 = vmatpush1.msra.mxu0 0.0
    %172 = vmatprep.subr.mxu0 0.0
    %173 = vmatpush1.msra.mxu0 0.0
    %174 = vmatprep.subr.mxu0 0.0
    %175 = vmatpush1.msra.mxu0 0.0
    %176 = vmatprep.mubr.f32.mxu0 0.0
    %177 = vmatmul.mubr.f32.gmra.mrb[0].mxu0 %v110
    %v178 = vpop.f32.mrb[0].mxu0
    %v179 = vadd.f32 0.0, %v178
    %v180 = vpop.f32.mrb[0].mxu0
    %181 = vdwg.mxu0
    %v183 = vrot.slane %v179, 7
    %v185 = vadd.f32 %v102, %v183
    %v186 = vtanh.pop %v185
    %vm187 = vcmask 254977
    %188 = vst.msk [vmem:[#allocation2] sm:$0x2] %vm187, %v186
    %v190 = vrot.slane %v186, 1
    %v191 = vsel %vm108, %v190, 0
    %193 = vmatprep.subr.mxu0 0.0
    %194 = vmatpush1.msra.mxu0 %v23
    %195 = vmatprep.subr.mxu0 0.0
    %196 = vmatpush1.msra.mxu0 %v24
    %197 = vmatprep.subr.mxu0 0.0
    %198 = vmatpush1.msra.mxu0 %v25
    %199 = vmatprep.subr.mxu0 0.0
    %200 = vmatpush1.msra.mxu0 %v26
    %201 = vmatprep.subr.mxu0 0.0
    %202 = vmatpush1.msra.mxu0 0.0
    %203 = vmatprep.subr.mxu0 0.0
    %204 = vmatpush1.msra.mxu0 0.0
    %205 = vmatprep.subr.mxu0 0.0
    %206 = vmatpush1.msra.mxu0 0.0
    %207 = vmatprep.subr.mxu0 0.0
    %208 = vmatpush1.msra.mxu0 0.0
    %209 = vmatprep.subr.mxu0 0.0
    %210 = vmatpush1.msra.mxu0 0.0
    %211 = vmatprep.subr.mxu0 0.0
    %212 = vmatpush1.msra.mxu0 0.0
    %213 = vmatprep.subr.mxu0 0.0
    %214 = vmatpush1.msra.mxu0 0.0
    %215 = vmatprep.subr.mxu0 0.0
    %216 = vmatpush1.msra.mxu0 0.0
    %217 = vmatprep.subr.mxu0 0.0
    %218 = vmatpush1.msra.mxu0 0.0
    %219 = vmatprep.subr.mxu0 0.0
    %220 = vmatpush1.msra.mxu0 0.0
    %221 = vmatprep.subr.mxu0 0.0
    %222 = vmatpush1.msra.mxu0 0.0
    %223 = vmatprep.subr.mxu0 0.0
    %224 = vmatpush1.msra.mxu0 0.0
    %225 = vmatprep.subr.mxu0 0.0
    %226 = vmatpush1.msra.mxu0 0.0
    %227 = vmatprep.subr.mxu0 0.0
    %228 = vmatpush1.msra.mxu0 0.0
    %229 = vmatprep.subr.mxu0 0.0
    %230 = vmatpush1.msra.mxu0 0.0
    %231 = vmatprep.subr.mxu0 0.0
    %232 = vmatpush1.msra.mxu0 0.0
    %233 = vmatprep.subr.mxu0 0.0
    %234 = vmatpush1.msra.mxu0 0.0
    %235 = vmatprep.subr.mxu0 0.0
    %236 = vmatpush1.msra.mxu0 0.0
    %237 = vmatprep.subr.mxu0 0.0
    %238 = vmatpush1.msra.mxu0 0.0
    %239 = vmatprep.subr.mxu0 0.0
    %240 = vmatpush1.msra.mxu0 0.0
    %241 = vmatprep.subr.mxu0 0.0
    %242 = vmatpush1.msra.mxu0 0.0
    %243 = vmatprep.subr.mxu0 0.0
    %244 = vmatpush1.msra.mxu0 0.0
    %245 = vmatprep.subr.mxu0 0.0
    %246 = vmatpush1.msra.mxu0 0.0
    %247 = vmatprep.subr.mxu0 0.0
    %248 = vmatpush1.msra.mxu0 0.0
    %249 = vmatprep.subr.mxu0 0.0
    %250 = vmatpush1.msra.mxu0 0.0
    %251 = vmatprep.subr.mxu0 0.0
    %252 = vmatpush1.msra.mxu0 0.0
    %253 = vmatprep.subr.mxu0 0.0
    %254 = vmatpush1.msra.mxu0 0.0
    %255 = vmatprep.subr.mxu0 0.0
    %256 = vmatpush1.msra.mxu0 0.0
    %257 = vmatprep.mubr.f32.mxu0 0.0
    %258 = vmatmul.mubr.f32.gmra.mrb[0].mxu0 %v191
    %v259 = vpop.f32.mrb[0].mxu0
    %v260 = vadd.f32 0.0, %v259
    %v261 = vpop.f32.mrb[0].mxu0
    %262 = vdwg.mxu0
    %v264 = vrot.slane %v260, 6
    %v266 = vadd.f32 %v102, %v264
    %v267 = vtanh.pop %v266
    %vm268 = vcmask 256002
    %269 = vst.msk [vmem:[#allocation2] sm:$0x4] %vm268, %v267
    %v271 = vrot.slane %v267, 2
    %v272 = vsel %vm108, %v271, 0
    %274 = vmatprep.subr.mxu0 0.0
    %275 = vmatpush1.msra.mxu0 %v23
    %276 = vmatprep.subr.mxu0 0.0
    %277 = vmatpush1.msra.mxu0 %v24
    %278 = vmatprep.subr.mxu0 0.0
    %279 = vmatpush1.msra.mxu0 %v25
    %280 = vmatprep.subr.mxu0 0.0
    %281 = vmatpush1.msra.mxu0 %v26
    %282 = vmatprep.subr.mxu0 0.0
    %283 = vmatpush1.msra.mxu0 0.0
    %284 = vmatprep.subr.mxu0 0.0
    %285 = vmatpush1.msra.mxu0 0.0
    %286 = vmatprep.subr.mxu0 0.0
    %287 = vmatpush1.msra.mxu0 0.0
    %288 = vmatprep.subr.mxu0 0.0
    %289 = vmatpush1.msra.mxu0 0.0
    %290 = vmatprep.subr.mxu0 0.0
    %291 = vmatpush1.msra.mxu0 0.0
    %292 = vmatprep.subr.mxu0 0.0
    %293 = vmatpush1.msra.mxu0 0.0
    %294 = vmatprep.subr.mxu0 0.0
    %295 = vmatpush1.msra.mxu0 0.0
    %296 = vmatprep.subr.mxu0 0.0
    %297 = vmatpush1.msra.mxu0 0.0
    %298 = vmatprep.subr.mxu0 0.0
    %299 = vmatpush1.msra.mxu0 0.0
    %300 = vmatprep.subr.mxu0 0.0
    %301 = vmatpush1.msra.mxu0 0.0
    %302 = vmatprep.subr.mxu0 0.0
    %303 = vmatpush1.msra.mxu0 0.0
    %304 = vmatprep.subr.mxu0 0.0
    %305 = vmatpush1.msra.mxu0 0.0
    %306 = vmatprep.subr.mxu0 0.0
    %307 = vmatpush1.msra.mxu0 0.0
    %308 = vmatprep.subr.mxu0 0.0
    %309 = vmatpush1.msra.mxu0 0.0
    %310 = vmatprep.subr.mxu0 0.0
    %311 = vmatpush1.msra.mxu0 0.0
    %312 = vmatprep.subr.mxu0 0.0
    %313 = vmatpush1.msra.mxu0 0.0
    %314 = vmatprep.subr.mxu0 0.0
    %315 = vmatpush1.msra.mxu0 0.0
    %316 = vmatprep.subr.mxu0 0.0
    %317 = vmatpush1.msra.mxu0 0.0
    %318 = vmatprep.subr.mxu0 0.0
    %319 = vmatpush1.msra.mxu0 0.0
    %320 = vmatprep.subr.mxu0 0.0
    %321 = vmatpush1.msra.mxu0 0.0
    %322 = vmatprep.subr.mxu0 0.0
    %323 = vmatpush1.msra.mxu0 0.0
    %324 = vmatprep.subr.mxu0 0.0
    %325 = vmatpush1.msra.mxu0 0.0
    %326 = vmatprep.subr.mxu0 0.0
    %327 = vmatpush1.msra.mxu0 0.0
    %328 = vmatprep.subr.mxu0 0.0
    %329 = vmatpush1.msra.mxu0 0.0
    %330 = vmatprep.subr.mxu0 0.0
    %331 = vmatpush1.msra.mxu0 0.0
    %332 = vmatprep.subr.mxu0 0.0
    %333 = vmatpush1.msra.mxu0 0.0
    %334 = vmatprep.subr.mxu0 0.0
    %335 = vmatpush1.msra.mxu0 0.0
    %336 = vmatprep.subr.mxu0 0.0
    %337 = vmatpush1.msra.mxu0 0.0
    %338 = vmatprep.mubr.f32.mxu0 0.0
    %339 = vmatmul.mubr.f32.gmra.mrb[0].mxu0 %v272
    %v340 = vpop.f32.mrb[0].mxu0
    %v341 = vadd.f32 0.0, %v340
    %v342 = vpop.f32.mrb[0].mxu0
    %343 = vdwg.mxu0
    %v345 = vrot.slane %v341, 5
    %v347 = vadd.f32 %v102, %v345
    %v348 = vtanh.pop %v347
    %vm349 = vcmask 257027
    %350 = vst.msk [vmem:[#allocation2] sm:$0x8] %vm349, %v348
    %v352 = vrot.slane %v348, 3
    %v353 = vsel %vm108, %v352, 0
    %355 = vmatprep.subr.mxu0 0.0
    %356 = vmatpush1.msra.mxu0 %v23
    %357 = vmatprep.subr.mxu0 0.0
    %358 = vmatpush1.msra.mxu0 %v24
    %359 = vmatprep.subr.mxu0 0.0
    %360 = vmatpush1.msra.mxu0 %v25
    %361 = vmatprep.subr.mxu0 0.0
    %362 = vmatpush1.msra.mxu0 %v26
    %363 = vmatprep.subr.mxu0 0.0
    %364 = vmatpush1.msra.mxu0 0.0
    %365 = vmatprep.subr.mxu0 0.0
    %366 = vmatpush1.msra.mxu0 0.0
    %367 = vmatprep.subr.mxu0 0.0
    %368 = vmatpush1.msra.mxu0 0.0
    %369 = vmatprep.subr.mxu0 0.0
    %370 = vmatpush1.msra.mxu0 0.0
    %371 = vmatprep.subr.mxu0 0.0
    %372 = vmatpush1.msra.mxu0 0.0
    %373 = vmatprep.subr.mxu0 0.0
    %374 = vmatpush1.msra.mxu0 0.0
    %375 = vmatprep.subr.mxu0 0.0
    %376 = vmatpush1.msra.mxu0 0.0
    %377 = vmatprep.subr.mxu0 0.0
    %378 = vmatpush1.msra.mxu0 0.0
    %379 = vmatprep.subr.mxu0 0.0
    %380 = vmatpush1.msra.mxu0 0.0
    %381 = vmatprep.subr.mxu0 0.0
    %382 = vmatpush1.msra.mxu0 0.0
    %383 = vmatprep.subr.mxu0 0.0
    %384 = vmatpush1.msra.mxu0 0.0
    %385 = vmatprep.subr.mxu0 0.0
    %386 = vmatpush1.msra.mxu0 0.0
    %387 = vmatprep.subr.mxu0 0.0
    %388 = vmatpush1.msra.mxu0 0.0
    %389 = vmatprep.subr.mxu0 0.0
    %390 = vmatpush1.msra.mxu0 0.0
    %391 = vmatprep.subr.mxu0 0.0
    %392 = vmatpush1.msra.mxu0 0.0
    %393 = vmatprep.subr.mxu0 0.0
    %394 = vmatpush1.msra.mxu0 0.0
    %395 = vmatprep.subr.mxu0 0.0
    %396 = vmatpush1.msra.mxu0 0.0
    %397 = vmatprep.subr.mxu0 0.0
    %398 = vmatpush1.msra.mxu0 0.0
    %399 = vmatprep.subr.mxu0 0.0
    %400 = vmatpush1.msra.mxu0 0.0
    %401 = vmatprep.subr.mxu0 0.0
    %402 = vmatpush1.msra.mxu0 0.0
    %403 = vmatprep.subr.mxu0 0.0
    %404 = vmatpush1.msra.mxu0 0.0
    %405 = vmatprep.subr.mxu0 0.0
    %406 = vmatpush1.msra.mxu0 0.0
    %407 = vmatprep.subr.mxu0 0.0
    %408 = vmatpush1.msra.mxu0 0.0
    %409 = vmatprep.subr.mxu0 0.0
    %410 = vmatpush1.msra.mxu0 0.0
    %411 = vmatprep.subr.mxu0 0.0
    %412 = vmatpush1.msra.mxu0 0.0
    %413 = vmatprep.subr.mxu0 0.0
    %414 = vmatpush1.msra.mxu0 0.0
    %415 = vmatprep.subr.mxu0 0.0
    %416 = vmatpush1.msra.mxu0 0.0
    %417 = vmatprep.subr.mxu0 0.0
    %418 = vmatpush1.msra.mxu0 0.0
    %419 = vmatprep.mubr.f32.mxu0 0.0
    %420 = vmatmul.mubr.f32.gmra.mrb[0].mxu0 %v353
    %v421 = vpop.f32.mrb[0].mxu0
    %v422 = vadd.f32 0.0, %v421
    %v423 = vpop.f32.mrb[0].mxu0
    %424 = vdwg.mxu0
    %v426 = vrot.slane %v422, 4
    %v428 = vadd.f32 %v102, %v426
    %v429 = vtanh.pop %v428
    %vm430 = vcmask 258052
    %431 = vst.msk [vmem:[#allocation2] sm:$0x10] %vm430, %v429
    %v433 = vrot.slane %v429, 4
    %v434 = vsel %vm108, %v433, 0
    %436 = vmatprep.subr.mxu0 0.0
    %437 = vmatpush1.msra.mxu0 %v23
    %438 = vmatprep.subr.mxu0 0.0
    %439 = vmatpush1.msra.mxu0 %v24
    %440 = vmatprep.subr.mxu0 0.0
    %441 = vmatpush1.msra.mxu0 %v25
    %442 = vmatprep.subr.mxu0 0.0
    %443 = vmatpush1.msra.mxu0 %v26
    %444 = vmatprep.subr.mxu0 0.0
    %445 = vmatpush1.msra.mxu0 0.0
    %446 = vmatprep.subr.mxu0 0.0
    %447 = vmatpush1.msra.mxu0 0.0
    %448 = vmatprep.subr.mxu0 0.0
    %449 = vmatpush1.msra.mxu0 0.0
    %450 = vmatprep.subr.mxu0 0.0
    %451 = vmatpush1.msra.mxu0 0.0
    %452 = vmatprep.subr.mxu0 0.0
    %453 = vmatpush1.msra.mxu0 0.0
    %454 = vmatprep.subr.mxu0 0.0
    %455 = vmatpush1.msra.mxu0 0.0
    %456 = vmatprep.subr.mxu0 0.0
    %457 = vmatpush1.msra.mxu0 0.0
    %458 = vmatprep.subr.mxu0 0.0
    %459 = vmatpush1.msra.mxu0 0.0
    %460 = vmatprep.subr.mxu0 0.0
    %461 = vmatpush1.msra.mxu0 0.0
    %462 = vmatprep.subr.mxu0 0.0
    %463 = vmatpush1.msra.mxu0 0.0
    %464 = vmatprep.subr.mxu0 0.0
    %465 = vmatpush1.msra.mxu0 0.0
    %466 = vmatprep.subr.mxu0 0.0
    %467 = vmatpush1.msra.mxu0 0.0
    %468 = vmatprep.subr.mxu0 0.0
    %469 = vmatpush1.msra.mxu0 0.0
    %470 = vmatprep.subr.mxu0 0.0
    %471 = vmatpush1.msra.mxu0 0.0
    %472 = vmatprep.subr.mxu0 0.0
    %473 = vmatpush1.msra.mxu0 0.0
    %474 = vmatprep.subr.mxu0 0.0
    %475 = vmatpush1.msra.mxu0 0.0
    %476 = vmatprep.subr.mxu0 0.0
    %477 = vmatpush1.msra.mxu0 0.0
    %478 = vmatprep.subr.mxu0 0.0
    %479 = vmatpush1.msra.mxu0 0.0
    %480 = vmatprep.subr.mxu0 0.0
    %481 = vmatpush1.msra.mxu0 0.0
    %482 = vmatprep.subr.mxu0 0.0
    %483 = vmatpush1.msra.mxu0 0.0
    %484 = vmatprep.subr.mxu0 0.0
    %485 = vmatpush1.msra.mxu0 0.0
    %486 = vmatprep.subr.mxu0 0.0
    %487 = vmatpush1.msra.mxu0 0.0
    %488 = vmatprep.subr.mxu0 0.0
    %489 = vmatpush1.msra.mxu0 0.0
    %490 = vmatprep.subr.mxu0 0.0
    %491 = vmatpush1.msra.mxu0 0.0
    %492 = vmatprep.subr.mxu0 0.0
    %493 = vmatpush1.msra.mxu0 0.0
    %494 = vmatprep.subr.mxu0 0.0
    %495 = vmatpush1.msra.mxu0 0.0
    %496 = vmatprep.subr.mxu0 0.0
    %497 = vmatpush1.msra.mxu0 0.0
    %498 = vmatprep.subr.mxu0 0.0
    %499 = vmatpush1.msra.mxu0 0.0
    %500 = vmatprep.mubr.f32.mxu0 0.0
    %501 = vmatmul.mubr.f32.gmra.mrb[0].mxu0 %v434
    %v502 = vpop.f32.mrb[0].mxu0
    %v503 = vadd.f32 0.0, %v502
    %v504 = vpop.f32.mrb[0].mxu0
    %505 = vdwg.mxu0
    %v507 = vrot.slane %v503, 3
    %v509 = vadd.f32 %v102, %v507
    %v510 = vtanh.pop %v509
    %vm511 = vcmask 259077
    %512 = vst.msk [vmem:[#allocation2] sm:$0x20] %vm511, %v510
    %v514 = vrot.slane %v510, 5
    %v515 = vsel %vm108, %v514, 0
    %517 = vmatprep.subr.mxu0 0.0
    %518 = vmatpush1.msra.mxu0 %v23
    %519 = vmatprep.subr.mxu0 0.0
    %520 = vmatpush1.msra.mxu0 %v24
    %521 = vmatprep.subr.mxu0 0.0
    %522 = vmatpush1.msra.mxu0 %v25
    %523 = vmatprep.subr.mxu0 0.0
    %524 = vmatpush1.msra.mxu0 %v26
    %525 = vmatprep.subr.mxu0 0.0
    %526 = vmatpush1.msra.mxu0 0.0
    %527 = vmatprep.subr.mxu0 0.0
    %528 = vmatpush1.msra.mxu0 0.0
    %529 = vmatprep.subr.mxu0 0.0
    %530 = vmatpush1.msra.mxu0 0.0
    %531 = vmatprep.subr.mxu0 0.0
    %532 = vmatpush1.msra.mxu0 0.0
    %533 = vmatprep.subr.mxu0 0.0
    %534 = vmatpush1.msra.mxu0 0.0
    %535 = vmatprep.subr.mxu0 0.0
    %536 = vmatpush1.msra.mxu0 0.0
    %537 = vmatprep.subr.mxu0 0.0
    %538 = vmatpush1.msra.mxu0 0.0
    %539 = vmatprep.subr.mxu0 0.0
    %540 = vmatpush1.msra.mxu0 0.0
    %541 = vmatprep.subr.mxu0 0.0
    %542 = vmatpush1.msra.mxu0 0.0
    %543 = vmatprep.subr.mxu0 0.0
    %544 = vmatpush1.msra.mxu0 0.0
    %545 = vmatprep.subr.mxu0 0.0
    %546 = vmatpush1.msra.mxu0 0.0
    %547 = vmatprep.subr.mxu0 0.0
    %548 = vmatpush1.msra.mxu0 0.0
    %549 = vmatprep.subr.mxu0 0.0
    %550 = vmatpush1.msra.mxu0 0.0
    %551 = vmatprep.subr.mxu0 0.0
    %552 = vmatpush1.msra.mxu0 0.0
    %553 = vmatprep.subr.mxu0 0.0
    %554 = vmatpush1.msra.mxu0 0.0
    %555 = vmatprep.subr.mxu0 0.0
    %556 = vmatpush1.msra.mxu0 0.0
    %557 = vmatprep.subr.mxu0 0.0
    %558 = vmatpush1.msra.mxu0 0.0
    %559 = vmatprep.subr.mxu0 0.0
    %560 = vmatpush1.msra.mxu0 0.0
    %561 = vmatprep.subr.mxu0 0.0
    %562 = vmatpush1.msra.mxu0 0.0
    %563 = vmatprep.subr.mxu0 0.0
    %564 = vmatpush1.msra.mxu0 0.0
    %565 = vmatprep.subr.mxu0 0.0
    %566 = vmatpush1.msra.mxu0 0.0
    %567 = vmatprep.subr.mxu0 0.0
    %568 = vmatpush1.msra.mxu0 0.0
    %569 = vmatprep.subr.mxu0 0.0
    %570 = vmatpush1.msra.mxu0 0.0
    %571 = vmatprep.subr.mxu0 0.0
    %572 = vmatpush1.msra.mxu0 0.0
    %573 = vmatprep.subr.mxu0 0.0
    %574 = vmatpush1.msra.mxu0 0.0
    %575 = vmatprep.subr.mxu0 0.0
    %576 = vmatpush1.msra.mxu0 0.0
    %577 = vmatprep.subr.mxu0 0.0
    %578 = vmatpush1.msra.mxu0 0.0
    %579 = vmatprep.subr.mxu0 0.0
    %580 = vmatpush1.msra.mxu0 0.0
    %581 = vmatprep.mubr.f32.mxu0 0.0
    %582 = vmatmul.mubr.f32.gmra.mrb[0].mxu0 %v515
    %v583 = vpop.f32.mrb[0].mxu0
    %v584 = vadd.f32 0.0, %v583
    %v585 = vpop.f32.mrb[0].mxu0
    %586 = vdwg.mxu0
    %v588 = vrot.slane %v584, 2
    %v590 = vadd.f32 %v102, %v588
    %v591 = vtanh.pop %v590
    %vm592 = vcmask 260102
    %593 = vst.msk [vmem:[#allocation2] sm:$0x40] %vm592, %v591
    %v595 = vrot.slane %v591, 6
    %v596 = vsel %vm108, %v595, 0
    %598 = vmatprep.subr.mxu0 0.0
    %599 = vmatpush1.msra.mxu0 %v23
    %600 = vmatprep.subr.mxu0 0.0
    %601 = vmatpush1.msra.mxu0 %v24
    %602 = vmatprep.subr.mxu0 0.0
    %603 = vmatpush1.msra.mxu0 %v25
    %604 = vmatprep.subr.mxu0 0.0
    %605 = vmatpush1.msra.mxu0 %v26
    %606 = vmatprep.subr.mxu0 0.0
    %607 = vmatpush1.msra.mxu0 0.0
    %608 = vmatprep.subr.mxu0 0.0
    %609 = vmatpush1.msra.mxu0 0.0
    %610 = vmatprep.subr.mxu0 0.0
    %611 = vmatpush1.msra.mxu0 0.0
    %612 = vmatprep.subr.mxu0 0.0
    %613 = vmatpush1.msra.mxu0 0.0
    %614 = vmatprep.subr.mxu0 0.0
    %615 = vmatpush1.msra.mxu0 0.0
    %616 = vmatprep.subr.mxu0 0.0
    %617 = vmatpush1.msra.mxu0 0.0
    %618 = vmatprep.subr.mxu0 0.0
    %619 = vmatpush1.msra.mxu0 0.0
    %620 = vmatprep.subr.mxu0 0.0
    %621 = vmatpush1.msra.mxu0 0.0
    %622 = vmatprep.subr.mxu0 0.0
    %623 = vmatpush1.msra.mxu0 0.0
    %624 = vmatprep.subr.mxu0 0.0
    %625 = vmatpush1.msra.mxu0 0.0
    %626 = vmatprep.subr.mxu0 0.0
    %627 = vmatpush1.msra.mxu0 0.0
    %628 = vmatprep.subr.mxu0 0.0
    %629 = vmatpush1.msra.mxu0 0.0
    %630 = vmatprep.subr.mxu0 0.0
    %631 = vmatpush1.msra.mxu0 0.0
    %632 = vmatprep.subr.mxu0 0.0
    %633 = vmatpush1.msra.mxu0 0.0
    %634 = vmatprep.subr.mxu0 0.0
    %635 = vmatpush1.msra.mxu0 0.0
    %636 = vmatprep.subr.mxu0 0.0
    %637 = vmatpush1.msra.mxu0 0.0
    %638 = vmatprep.subr.mxu0 0.0
    %639 = vmatpush1.msra.mxu0 0.0
    %640 = vmatprep.subr.mxu0 0.0
    %641 = vmatpush1.msra.mxu0 0.0
    %642 = vmatprep.subr.mxu0 0.0
    %643 = vmatpush1.msra.mxu0 0.0
    %644 = vmatprep.subr.mxu0 0.0
    %645 = vmatpush1.msra.mxu0 0.0
    %646 = vmatprep.subr.mxu0 0.0
    %647 = vmatpush1.msra.mxu0 0.0
    %648 = vmatprep.subr.mxu0 0.0
    %649 = vmatpush1.msra.mxu0 0.0
    %650 = vmatprep.subr.mxu0 0.0
    %651 = vmatpush1.msra.mxu0 0.0
    %652 = vmatprep.subr.mxu0 0.0
    %653 = vmatpush1.msra.mxu0 0.0
    %654 = vmatprep.subr.mxu0 0.0
    %655 = vmatpush1.msra.mxu0 0.0
    %656 = vmatprep.subr.mxu0 0.0
    %657 = vmatpush1.msra.mxu0 0.0
    %658 = vmatprep.subr.mxu0 0.0
    %659 = vmatpush1.msra.mxu0 0.0
    %660 = vmatprep.subr.mxu0 0.0
    %661 = vmatpush1.msra.mxu0 0.0
    %662 = vmatprep.mubr.f32.mxu0 0.0
    %663 = vmatmul.mubr.f32.gmra.mrb[0].mxu0 %v596
    %v664 = vpop.f32.mrb[0].mxu0
    %v665 = vadd.f32 0.0, %v664
    %v666 = vpop.f32.mrb[0].mxu0
    %667 = vdwg.mxu0
    %v669 = vrot.slane %v665, 1
    %v671 = vadd.f32 %v102, %v669
    %v672 = vtanh.pop %v671
    %vm673 = vcmask 261127
    %674 = vst.msk [vmem:[#allocation2] sm:$0x80] %vm673, %v672
    %v675 = vld [vmem:[#allocation2] sm:$0xff]
    %v676 = vld [vmem:[%s1 + $0x30] sm:$0xff]
    %v677 = vld [vmem:[%s1 + $0x38] sm:$0xff]
    %v678 = vld [vmem:[%s1 + $0x40] sm:$0xff]
    %v679 = vld [vmem:[%s1 + $0x48] sm:$0xff]
    %v680 = vld [vmem:[%s1 + $0x50] sm:$0xff]
    %v681 = vld [vmem:[%s1 + $0x58] sm:$0xff]
    %v682 = vld [vmem:[%s1 + $0x60] sm:$0xff]
    %v683 = vld [vmem:[%s1 + $0x68] sm:$0xff]
    %v684 = vlaneseq
    %v685 = vshrl.u32 %v684, 7
    %v686 = vsub.s32 1, %v685
    %v687 = vrot.slane %v19, %v686
    %v689 = vsel %vm108, %v675, 0
    %691 = vmatprep.subr.mxu0 0.0
    %692 = vmatpush1.msra.mxu0 %v676
    %693 = vmatprep.subr.mxu0 0.0
    %694 = vmatpush1.msra.mxu0 %v677
    %695 = vmatprep.subr.mxu0 0.0
    %696 = vmatpush1.msra.mxu0 %v678
    %697 = vmatprep.subr.mxu0 0.0
    %698 = vmatpush1.msra.mxu0 %v679
    %699 = vmatprep.subr.mxu0 0.0
    %700 = vmatpush1.msra.mxu0 0.0
    %701 = vmatprep.subr.mxu0 0.0
    %702 = vmatpush1.msra.mxu0 0.0
    %703 = vmatprep.subr.mxu0 0.0
    %704 = vmatpush1.msra.mxu0 0.0
    %705 = vmatprep.subr.mxu0 0.0
    %706 = vmatpush1.msra.mxu0 0.0
    %707 = vmatprep.subr.mxu0 0.0
    %708 = vmatpush1.msra.mxu0 0.0
    %709 = vmatprep.subr.mxu0 0.0
    %710 = vmatpush1.msra.mxu0 0.0
    %711 = vmatprep.subr.mxu0 0.0
    %712 = vmatpush1.msra.mxu0 0.0
    %713 = vmatprep.subr.mxu0 0.0
    %714 = vmatpush1.msra.mxu0 0.0
    %715 = vmatprep.subr.mxu0 0.0
    %716 = vmatpush1.msra.mxu0 0.0
    %717 = vmatprep.subr.mxu0 0.0
    %718 = vmatpush1.msra.mxu0 0.0
    %719 = vmatprep.subr.mxu0 0.0
    %720 = vmatpush1.msra.mxu0 0.0
    %721 = vmatprep.subr.mxu0 0.0
    %722 = vmatpush1.msra.mxu0 0.0
    %723 = vmatprep.subr.mxu0 0.0
    %724 = vmatpush1.msra.mxu0 0.0
    %725 = vmatprep.subr.mxu0 0.0
    %726 = vmatpush1.msra.mxu0 0.0
    %727 = vmatprep.subr.mxu0 0.0
    %728 = vmatpush1.msra.mxu0 0.0
    %729 = vmatprep.subr.mxu0 0.0
    %730 = vmatpush1.msra.mxu0 0.0
    %731 = vmatprep.subr.mxu0 0.0
    %732 = vmatpush1.msra.mxu0 0.0
    %733 = vmatprep.subr.mxu0 0.0
    %734 = vmatpush1.msra.mxu0 0.0
    %735 = vmatprep.subr.mxu0 0.0
    %736 = vmatpush1.msra.mxu0 0.0
    %737 = vmatprep.subr.mxu0 0.0
    %738 = vmatpush1.msra.mxu0 0.0
    %739 = vmatprep.subr.mxu0 0.0
    %740 = vmatpush1.msra.mxu0 0.0
    %741 = vmatprep.subr.mxu0 0.0
    %742 = vmatpush1.msra.mxu0 0.0
    %743 = vmatprep.subr.mxu0 0.0
    %744 = vmatpush1.msra.mxu0 0.0
    %745 = vmatprep.subr.mxu0 0.0
    %746 = vmatpush1.msra.mxu0 0.0
    %747 = vmatprep.subr.mxu0 0.0
    %748 = vmatpush1.msra.mxu0 0.0
    %749 = vmatprep.subr.mxu0 0.0
    %750 = vmatpush1.msra.mxu0 0.0
    %751 = vmatprep.subr.mxu0 0.0
    %752 = vmatpush1.msra.mxu0 0.0
    %753 = vmatprep.subr.mxu0 0.0
    %754 = vmatpush1.msra.mxu0 0.0
    %755 = vmatprep.mubr.f32.mxu0 0.0
    %756 = vmatmul.mubr.f32.gmra.mrb[0].mxu0 %v689
    %v757 = vpop.f32.mrb[0].mxu0
    %v758 = vadd.f32 %v687, %v757
    %v759 = vpop.f32.mrb[0].mxu0
    %760 = vdwg.mxu0
    %v761 = vtanh.pop %v758
    %762 = vst.msk [vmem:[#allocation2] sm:$0x1] %vm106, %v761
    %v764 = vsel %vm108, %v761, 0
    %766 = vmatprep.subr.mxu0 0.0
    %767 = vmatpush1.msra.mxu0 %v680
    %768 = vmatprep.subr.mxu0 0.0
    %769 = vmatpush1.msra.mxu0 %v681
    %770 = vmatprep.subr.mxu0 0.0
    %771 = vmatpush1.msra.mxu0 %v682
    %772 = vmatprep.subr.mxu0 0.0
    %773 = vmatpush1.msra.mxu0 %v683
    %774 = vmatprep.subr.mxu0 0.0
    %775 = vmatpush1.msra.mxu0 0.0
    %776 = vmatprep.subr.mxu0 0.0
    %777 = vmatpush1.msra.mxu0 0.0
    %778 = vmatprep.subr.mxu0 0.0
    %779 = vmatpush1.msra.mxu0 0.0
    %780 = vmatprep.subr.mxu0 0.0
    %781 = vmatpush1.msra.mxu0 0.0
    %782 = vmatprep.subr.mxu0 0.0
    %783 = vmatpush1.msra.mxu0 0.0
    %784 = vmatprep.subr.mxu0 0.0
    %785 = vmatpush1.msra.mxu0 0.0
    %786 = vmatprep.subr.mxu0 0.0
    %787 = vmatpush1.msra.mxu0 0.0
    %788 = vmatprep.subr.mxu0 0.0
    %789 = vmatpush1.msra.mxu0 0.0
    %790 = vmatprep.subr.mxu0 0.0
    %791 = vmatpush1.msra.mxu0 0.0
    %792 = vmatprep.subr.mxu0 0.0
    %793 = vmatpush1.msra.mxu0 0.0
    %794 = vmatprep.subr.mxu0 0.0
    %795 = vmatpush1.msra.mxu0 0.0
    %796 = vmatprep.subr.mxu0 0.0
    %797 = vmatpush1.msra.mxu0 0.0
    %798 = vmatprep.subr.mxu0 0.0
    %799 = vmatpush1.msra.mxu0 0.0
    %800 = vmatprep.subr.mxu0 0.0
    %801 = vmatpush1.msra.mxu0 0.0
    %802 = vmatprep.subr.mxu0 0.0
    %803 = vmatpush1.msra.mxu0 0.0
    %804 = vmatprep.subr.mxu0 0.0
    %805 = vmatpush1.msra.mxu0 0.0
    %806 = vmatprep.subr.mxu0 0.0
    %807 = vmatpush1.msra.mxu0 0.0
    %808 = vmatprep.subr.mxu0 0.0
    %809 = vmatpush1.msra.mxu0 0.0
    %810 = vmatprep.subr.mxu0 0.0
    %811 = vmatpush1.msra.mxu0 0.0
    %812 = vmatprep.subr.mxu0 0.0
    %813 = vmatpush1.msra.mxu0 0.0
    %814 = vmatprep.subr.mxu0 0.0
    %815 = vmatpush1.msra.mxu0 0.0
    %816 = vmatprep.subr.mxu0 0.0
    %817 = vmatpush1.msra.mxu0 0.0
    %818 = vmatprep.subr.mxu0 0.0
    %819 = vmatpush1.msra.mxu0 0.0
    %820 = vmatprep.subr.mxu0 0.0
    %821 = vmatpush1.msra.mxu0 0.0
    %822 = vmatprep.subr.mxu0 0.0
    %823 = vmatpush1.msra.mxu0 0.0
    %824 = vmatprep.subr.mxu0 0.0
    %825 = vmatpush1.msra.mxu0 0.0
    %826 = vmatprep.subr.mxu0 0.0
    %827 = vmatpush1.msra.mxu0 0.0
    %828 = vmatprep.subr.mxu0 0.0
    %829 = vmatpush1.msra.mxu0 0.0
    %830 = vmatprep.mubr.f32.mxu0 0.0
    %831 = vmatmul.mubr.f32.gmra.mrb[0].mxu0 %v764
    %v832 = vpop.f32.mrb[0].mxu0
    %v833 = vadd.f32 0.0, %v832
    %v834 = vpop.f32.mrb[0].mxu0
    %835 = vdwg.mxu0
    %v837 = vrot.slane %v833, 7
    %v839 = vadd.f32 %v758, %v837
    %v840 = vtanh.pop %v839
    %841 = vst.msk [vmem:[#allocation2] sm:$0x2] %vm187, %v840
    %v843 = vrot.slane %v840, 1
    %v844 = vsel %vm108, %v843, 0
    %846 = vmatprep.subr.mxu0 0.0
    %847 = vmatpush1.msra.mxu0 %v680
    %848 = vmatprep.subr.mxu0 0.0
    %849 = vmatpush1.msra.mxu0 %v681
    %850 = vmatprep.subr.mxu0 0.0
    %851 = vmatpush1.msra.mxu0 %v682
    %852 = vmatprep.subr.mxu0 0.0
    %853 = vmatpush1.msra.mxu0 %v683
    %854 = vmatprep.subr.mxu0 0.0
    %855 = vmatpush1.msra.mxu0 0.0
    %856 = vmatprep.subr.mxu0 0.0
    %857 = vmatpush1.msra.mxu0 0.0
    %858 = vmatprep.subr.mxu0 0.0
    %859 = vmatpush1.msra.mxu0 0.0
    %860 = vmatprep.subr.mxu0 0.0
    %861 = vmatpush1.msra.mxu0 0.0
    %862 = vmatprep.subr.mxu0 0.0
    %863 = vmatpush1.msra.mxu0 0.0
    %864 = vmatprep.subr.mxu0 0.0
    %865 = vmatpush1.msra.mxu0 0.0
    %866 = vmatprep.subr.mxu0 0.0
    %867 = vmatpush1.msra.mxu0 0.0
    %868 = vmatprep.subr.mxu0 0.0
    %869 = vmatpush1.msra.mxu0 0.0
    %870 = vmatprep.subr.mxu0 0.0
    %871 = vmatpush1.msra.mxu0 0.0
    %872 = vmatprep.subr.mxu0 0.0
    %873 = vmatpush1.msra.mxu0 0.0
    %874 = vmatprep.subr.mxu0 0.0
    %875 = vmatpush1.msra.mxu0 0.0
    %876 = vmatprep.subr.mxu0 0.0
    %877 = vmatpush1.msra.mxu0 0.0
    %878 = vmatprep.subr.mxu0 0.0
    %879 = vmatpush1.msra.mxu0 0.0
    %880 = vmatprep.subr.mxu0 0.0
    %881 = vmatpush1.msra.mxu0 0.0
    %882 = vmatprep.subr.mxu0 0.0
    %883 = vmatpush1.msra.mxu0 0.0
    %884 = vmatprep.subr.mxu0 0.0
    %885 = vmatpush1.msra.mxu0 0.0
    %886 = vmatprep.subr.mxu0 0.0
    %887 = vmatpush1.msra.mxu0 0.0
    %888 = vmatprep.subr.mxu0 0.0
    %889 = vmatpush1.msra.mxu0 0.0
    %890 = vmatprep.subr.mxu0 0.0
    %891 = vmatpush1.msra.mxu0 0.0
    %892 = vmatprep.subr.mxu0 0.0
    %893 = vmatpush1.msra.mxu0 0.0
    %894 = vmatprep.subr.mxu0 0.0
    %895 = vmatpush1.msra.mxu0 0.0
    %896 = vmatprep.subr.mxu0 0.0
    %897 = vmatpush1.msra.mxu0 0.0
    %898 = vmatprep.subr.mxu0 0.0
    %899 = vmatpush1.msra.mxu0 0.0
    %900 = vmatprep.subr.mxu0 0.0
    %901 = vmatpush1.msra.mxu0 0.0
    %902 = vmatprep.subr.mxu0 0.0
    %903 = vmatpush1.msra.mxu0 0.0
    %904 = vmatprep.subr.mxu0 0.0
    %905 = vmatpush1.msra.mxu0 0.0
    %906 = vmatprep.subr.mxu0 0.0
    %907 = vmatpush1.msra.mxu0 0.0
    %908 = vmatprep.subr.mxu0 0.0
    %909 = vmatpush1.msra.mxu0 0.0
    %910 = vmatprep.mubr.f32.mxu0 0.0
    %911 = vmatmul.mubr.f32.gmra.mrb[0].mxu0 %v844
    %v912 = vpop.f32.mrb[0].mxu0
    %v913 = vadd.f32 0.0, %v912
    %v914 = vpop.f32.mrb[0].mxu0
    %915 = vdwg.mxu0
    %v917 = vrot.slane %v913, 6
    %v919 = vadd.f32 %v758, %v917
    %v920 = vtanh.pop %v919
    %921 = vst.msk [vmem:[#allocation2] sm:$0x4] %vm268, %v920
    %v923 = vrot.slane %v920, 2
    %v924 = vsel %vm108, %v923, 0
    %926 = vmatprep.subr.mxu0 0.0
    %927 = vmatpush1.msra.mxu0 %v680
    %928 = vmatprep.subr.mxu0 0.0
    %929 = vmatpush1.msra.mxu0 %v681
    %930 = vmatprep.subr.mxu0 0.0
    %931 = vmatpush1.msra.mxu0 %v682
    %932 = vmatprep.subr.mxu0 0.0
    %933 = vmatpush1.msra.mxu0 %v683
    %934 = vmatprep.subr.mxu0 0.0
    %935 = vmatpush1.msra.mxu0 0.0
    %936 = vmatprep.subr.mxu0 0.0
    %937 = vmatpush1.msra.mxu0 0.0
    %938 = vmatprep.subr.mxu0 0.0
    %939 = vmatpush1.msra.mxu0 0.0
    %940 = vmatprep.subr.mxu0 0.0
    %941 = vmatpush1.msra.mxu0 0.0
    %942 = vmatprep.subr.mxu0 0.0
    %943 = vmatpush1.msra.mxu0 0.0
    %944 = vmatprep.subr.mxu0 0.0
    %945 = vmatpush1.msra.mxu0 0.0
    %946 = vmatprep.subr.mxu0 0.0
    %947 = vmatpush1.msra.mxu0 0.0
    %948 = vmatprep.subr.mxu0 0.0
    %949 = vmatpush1.msra.mxu0 0.0
    %950 = vmatprep.subr.mxu0 0.0
    %951 = vmatpush1.msra.mxu0 0.0
    %952 = vmatprep.subr.mxu0 0.0
    %953 = vmatpush1.msra.mxu0 0.0
    %954 = vmatprep.subr.mxu0 0.0
    %955 = vmatpush1.msra.mxu0 0.0
    %956 = vmatprep.subr.mxu0 0.0
    %957 = vmatpush1.msra.mxu0 0.0
    %958 = vmatprep.subr.mxu0 0.0
    %959 = vmatpush1.msra.mxu0 0.0
    %960 = vmatprep.subr.mxu0 0.0
    %961 = vmatpush1.msra.mxu0 0.0
    %962 = vmatprep.subr.mxu0 0.0
    %963 = vmatpush1.msra.mxu0 0.0
    %964 = vmatprep.subr.mxu0 0.0
    %965 = vmatpush1.msra.mxu0 0.0
    %966 = vmatprep.subr.mxu0 0.0
    %967 = vmatpush1.msra.mxu0 0.0
    %968 = vmatprep.subr.mxu0 0.0
    %969 = vmatpush1.msra.mxu0 0.0
    %970 = vmatprep.subr.mxu0 0.0
    %971 = vmatpush1.msra.mxu0 0.0
    %972 = vmatprep.subr.mxu0 0.0
    %973 = vmatpush1.msra.mxu0 0.0
    %974 = vmatprep.subr.mxu0 0.0
    %975 = vmatpush1.msra.mxu0 0.0
    %976 = vmatprep.subr.mxu0 0.0
    %977 = vmatpush1.msra.mxu0 0.0
    %978 = vmatprep.subr.mxu0 0.0
    %979 = vmatpush1.msra.mxu0 0.0
    %980 = vmatprep.subr.mxu0 0.0
    %981 = vmatpush1.msra.mxu0 0.0
    %982 = vmatprep.subr.mxu0 0.0
    %983 = vmatpush1.msra.mxu0 0.0
    %984 = vmatprep.subr.mxu0 0.0
    %985 = vmatpush1.msra.mxu0 0.0
    %986 = vmatprep.subr.mxu0 0.0
    %987 = vmatpush1.msra.mxu0 0.0
    %988 = vmatprep.subr.mxu0 0.0
    %989 = vmatpush1.msra.mxu0 0.0
    %990 = vmatprep.mubr.f32.mxu0 0.0
    %991 = vmatmul.mubr.f32.gmra.mrb[0].mxu0 %v924
    %v992 = vpop.f32.mrb[0].mxu0
    %v993 = vadd.f32 0.0, %v992
    %v994 = vpop.f32.mrb[0].mxu0
    %995 = vdwg.mxu0
    %v997 = vrot.slane %v993, 5
    %v999 = vadd.f32 %v758, %v997
    %v1000 = vtanh.pop %v999
    %1001 = vst.msk [vmem:[#allocation2] sm:$0x8] %vm349, %v1000
    %v1003 = vrot.slane %v1000, 3
    %v1004 = vsel %vm108, %v1003, 0
    %1006 = vmatprep.subr.mxu0 0.0
    %1007 = vmatpush1.msra.mxu0 %v680
    %1008 = vmatprep.subr.mxu0 0.0
    %1009 = vmatpush1.msra.mxu0 %v681
    %1010 = vmatprep.subr.mxu0 0.0
    %1011 = vmatpush1.msra.mxu0 %v682
    %1012 = vmatprep.subr.mxu0 0.0
    %1013 = vmatpush1.msra.mxu0 %v683
    %1014 = vmatprep.subr.mxu0 0.0
    %1015 = vmatpush1.msra.mxu0 0.0
    %1016 = vmatprep.subr.mxu0 0.0
    %1017 = vmatpush1.msra.mxu0 0.0
    %1018 = vmatprep.subr.mxu0 0.0
    %1019 = vmatpush1.msra.mxu0 0.0
    %1020 = vmatprep.subr.mxu0 0.0
    %1021 = vmatpush1.msra.mxu0 0.0
    %1022 = vmatprep.subr.mxu0 0.0
    %1023 = vmatpush1.msra.mxu0 0.0
    %1024 = vmatprep.subr.mxu0 0.0
    %1025 = vmatpush1.msra.mxu0 0.0
    %1026 = vmatprep.subr.mxu0 0.0
    %1027 = vmatpush1.msra.mxu0 0.0
    %1028 = vmatprep.subr.mxu0 0.0
    %1029 = vmatpush1.msra.mxu0 0.0
    %1030 = vmatprep.subr.mxu0 0.0
    %1031 = vmatpush1.msra.mxu0 0.0
    %1032 = vmatprep.subr.mxu0 0.0
    %1033 = vmatpush1.msra.mxu0 0.0
    %1034 = vmatprep.subr.mxu0 0.0
    %1035 = vmatpush1.msra.mxu0 0.0
    %1036 = vmatprep.subr.mxu0 0.0
    %1037 = vmatpush1.msra.mxu0 0.0
    %1038 = vmatprep.subr.mxu0 0.0
    %1039 = vmatpush1.msra.mxu0 0.0
    %1040 = vmatprep.subr.mxu0 0.0
    %1041 = vmatpush1.msra.mxu0 0.0
    %1042 = vmatprep.subr.mxu0 0.0
    %1043 = vmatpush1.msra.mxu0 0.0
    %1044 = vmatprep.subr.mxu0 0.0
    %1045 = vmatpush1.msra.mxu0 0.0
    %1046 = vmatprep.subr.mxu0 0.0
    %1047 = vmatpush1.msra.mxu0 0.0
    %1048 = vmatprep.subr.mxu0 0.0
    %1049 = vmatpush1.msra.mxu0 0.0
    %1050 = vmatprep.subr.mxu0 0.0
    %1051 = vmatpush1.msra.mxu0 0.0
    %1052 = vmatprep.subr.mxu0 0.0
    %1053 = vmatpush1.msra.mxu0 0.0
    %1054 = vmatprep.subr.mxu0 0.0
    %1055 = vmatpush1.msra.mxu0 0.0
    %1056 = vmatprep.subr.mxu0 0.0
    %1057 = vmatpush1.msra.mxu0 0.0
    %1058 = vmatprep.subr.mxu0 0.0
    %1059 = vmatpush1.msra.mxu0 0.0
    %1060 = vmatprep.subr.mxu0 0.0
    %1061 = vmatpush1.msra.mxu0 0.0
    %1062 = vmatprep.subr.mxu0 0.0
    %1063 = vmatpush1.msra.mxu0 0.0
    %1064 = vmatprep.subr.mxu0 0.0
    %1065 = vmatpush1.msra.mxu0 0.0
    %1066 = vmatprep.subr.mxu0 0.0
    %1067 = vmatpush1.msra.mxu0 0.0
    %1068 = vmatprep.subr.mxu0 0.0
    %1069 = vmatpush1.msra.mxu0 0.0
    %1070 = vmatprep.mubr.f32.mxu0 0.0
    %1071 = vmatmul.mubr.f32.gmra.mrb[0].mxu0 %v1004
    %v1072 = vpop.f32.mrb[0].mxu0
    %v1073 = vadd.f32 0.0, %v1072
    %v1074 = vpop.f32.mrb[0].mxu0
    %1075 = vdwg.mxu0
    %v1077 = vrot.slane %v1073, 4
    %v1079 = vadd.f32 %v758, %v1077
    %v1080 = vtanh.pop %v1079
    %1081 = vst.msk [vmem:[#allocation2] sm:$0x10] %vm430, %v1080
    %v1083 = vrot.slane %v1080, 4
    %v1084 = vsel %vm108, %v1083, 0
    %1086 = vmatprep.subr.mxu0 0.0
    %1087 = vmatpush1.msra.mxu0 %v680
    %1088 = vmatprep.subr.mxu0 0.0
    %1089 = vmatpush1.msra.mxu0 %v681
    %1090 = vmatprep.subr.mxu0 0.0
    %1091 = vmatpush1.msra.mxu0 %v682
    %1092 = vmatprep.subr.mxu0 0.0
    %1093 = vmatpush1.msra.mxu0 %v683
    %1094 = vmatprep.subr.mxu0 0.0
    %1095 = vmatpush1.msra.mxu0 0.0
    %1096 = vmatprep.subr.mxu0 0.0
    %1097 = vmatpush1.msra.mxu0 0.0
    %1098 = vmatprep.subr.mxu0 0.0
    %1099 = vmatpush1.msra.mxu0 0.0
    %1100 = vmatprep.subr.mxu0 0.0
    %1101 = vmatpush1.msra.mxu0 0.0
    %1102 = vmatprep.subr.mxu0 0.0
    %1103 = vmatpush1.msra.mxu0 0.0
    %1104 = vmatprep.subr.mxu0 0.0
    %1105 = vmatpush1.msra.mxu0 0.0
    %1106 = vmatprep.subr.mxu0 0.0
    %1107 = vmatpush1.msra.mxu0 0.0
    %1108 = vmatprep.subr.mxu0 0.0
    %1109 = vmatpush1.msra.mxu0 0.0
    %1110 = vmatprep.subr.mxu0 0.0
    %1111 = vmatpush1.msra.mxu0 0.0
    %1112 = vmatprep.subr.mxu0 0.0
    %1113 = vmatpush1.msra.mxu0 0.0
    %1114 = vmatprep.subr.mxu0 0.0
    %1115 = vmatpush1.msra.mxu0 0.0
    %1116 = vmatprep.subr.mxu0 0.0
    %1117 = vmatpush1.msra.mxu0 0.0
    %1118 = vmatprep.subr.mxu0 0.0
    %1119 = vmatpush1.msra.mxu0 0.0
    %1120 = vmatprep.subr.mxu0 0.0
    %1121 = vmatpush1.msra.mxu0 0.0
    %1122 = vmatprep.subr.mxu0 0.0
    %1123 = vmatpush1.msra.mxu0 0.0
    %1124 = vmatprep.subr.mxu0 0.0
    %1125 = vmatpush1.msra.mxu0 0.0
    %1126 = vmatprep.subr.mxu0 0.0
    %1127 = vmatpush1.msra.mxu0 0.0
    %1128 = vmatprep.subr.mxu0 0.0
    %1129 = vmatpush1.msra.mxu0 0.0
    %1130 = vmatprep.subr.mxu0 0.0
    %1131 = vmatpush1.msra.mxu0 0.0
    %1132 = vmatprep.subr.mxu0 0.0
    %1133 = vmatpush1.msra.mxu0 0.0
    %1134 = vmatprep.subr.mxu0 0.0
    %1135 = vmatpush1.msra.mxu0 0.0
    %1136 = vmatprep.subr.mxu0 0.0
    %1137 = vmatpush1.msra.mxu0 0.0
    %1138 = vmatprep.subr.mxu0 0.0
    %1139 = vmatpush1.msra.mxu0 0.0
    %1140 = vmatprep.subr.mxu0 0.0
    %1141 = vmatpush1.msra.mxu0 0.0
    %1142 = vmatprep.subr.mxu0 0.0
    %1143 = vmatpush1.msra.mxu0 0.0
    %1144 = vmatprep.subr.mxu0 0.0
    %1145 = vmatpush1.msra.mxu0 0.0
    %1146 = vmatprep.subr.mxu0 0.0
    %1147 = vmatpush1.msra.mxu0 0.0
    %1148 = vmatprep.subr.mxu0 0.0
    %1149 = vmatpush1.msra.mxu0 0.0
    %1150 = vmatprep.mubr.f32.mxu0 0.0
    %1151 = vmatmul.mubr.f32.gmra.mrb[0].mxu0 %v1084
    %v1152 = vpop.f32.mrb[0].mxu0
    %v1153 = vadd.f32 0.0, %v1152
    %v1154 = vpop.f32.mrb[0].mxu0
    %1155 = vdwg.mxu0
    %v1157 = vrot.slane %v1153, 3
    %v1159 = vadd.f32 %v758, %v1157
    %v1160 = vtanh.pop %v1159
    %1161 = vst.msk [vmem:[#allocation2] sm:$0x20] %vm511, %v1160
    %v1163 = vrot.slane %v1160, 5
    %v1164 = vsel %vm108, %v1163, 0
    %1166 = vmatprep.subr.mxu0 0.0
    %1167 = vmatpush1.msra.mxu0 %v680
    %1168 = vmatprep.subr.mxu0 0.0
    %1169 = vmatpush1.msra.mxu0 %v681
    %1170 = vmatprep.subr.mxu0 0.0
    %1171 = vmatpush1.msra.mxu0 %v682
    %1172 = vmatprep.subr.mxu0 0.0
    %1173 = vmatpush1.msra.mxu0 %v683
    %1174 = vmatprep.subr.mxu0 0.0
    %1175 = vmatpush1.msra.mxu0 0.0
    %1176 = vmatprep.subr.mxu0 0.0
    %1177 = vmatpush1.msra.mxu0 0.0
    %1178 = vmatprep.subr.mxu0 0.0
    %1179 = vmatpush1.msra.mxu0 0.0
    %1180 = vmatprep.subr.mxu0 0.0
    %1181 = vmatpush1.msra.mxu0 0.0
    %1182 = vmatprep.subr.mxu0 0.0
    %1183 = vmatpush1.msra.mxu0 0.0
    %1184 = vmatprep.subr.mxu0 0.0
    %1185 = vmatpush1.msra.mxu0 0.0
    %1186 = vmatprep.subr.mxu0 0.0
    %1187 = vmatpush1.msra.mxu0 0.0
    %1188 = vmatprep.subr.mxu0 0.0
    %1189 = vmatpush1.msra.mxu0 0.0
    %1190 = vmatprep.subr.mxu0 0.0
    %1191 = vmatpush1.msra.mxu0 0.0
    %1192 = vmatprep.subr.mxu0 0.0
    %1193 = vmatpush1.msra.mxu0 0.0
    %1194 = vmatprep.subr.mxu0 0.0
    %1195 = vmatpush1.msra.mxu0 0.0
    %1196 = vmatprep.subr.mxu0 0.0
    %1197 = vmatpush1.msra.mxu0 0.0
    %1198 = vmatprep.subr.mxu0 0.0
    %1199 = vmatpush1.msra.mxu0 0.0
    %1200 = vmatprep.subr.mxu0 0.0
    %1201 = vmatpush1.msra.mxu0 0.0
    %1202 = vmatprep.subr.mxu0 0.0
    %1203 = vmatpush1.msra.mxu0 0.0
    %1204 = vmatprep.subr.mxu0 0.0
    %1205 = vmatpush1.msra.mxu0 0.0
    %1206 = vmatprep.subr.mxu0 0.0
    %1207 = vmatpush1.msra.mxu0 0.0
    %1208 = vmatprep.subr.mxu0 0.0
    %1209 = vmatpush1.msra.mxu0 0.0
    %1210 = vmatprep.subr.mxu0 0.0
    %1211 = vmatpush1.msra.mxu0 0.0
    %1212 = vmatprep.subr.mxu0 0.0
    %1213 = vmatpush1.msra.mxu0 0.0
    %1214 = vmatprep.subr.mxu0 0.0
    %1215 = vmatpush1.msra.mxu0 0.0
    %1216 = vmatprep.subr.mxu0 0.0
    %1217 = vmatpush1.msra.mxu0 0.0
    %1218 = vmatprep.subr.mxu0 0.0
    %1219 = vmatpush1.msra.mxu0 0.0
    %1220 = vmatprep.subr.mxu0 0.0
    %1221 = vmatpush1.msra.mxu0 0.0
    %1222 = vmatprep.subr.mxu0 0.0
    %1223 = vmatpush1.msra.mxu0 0.0
    %1224 = vmatprep.subr.mxu0 0.0
    %1225 = vmatpush1.msra.mxu0 0.0
    %1226 = vmatprep.subr.mxu0 0.0
    %1227 = vmatpush1.msra.mxu0 0.0
    %1228 = vmatprep.subr.mxu0 0.0
    %1229 = vmatpush1.msra.mxu0 0.0
    %1230 = vmatprep.mubr.f32.mxu0 0.0
    %1231 = vmatmul.mubr.f32.gmra.mrb[0].mxu0 %v1164
    %v1232 = vpop.f32.mrb[0].mxu0
    %v1233 = vadd.f32 0.0, %v1232
    %v1234 = vpop.f32.mrb[0].mxu0
    %1235 = vdwg.mxu0
    %v1237 = vrot.slane %v1233, 2
    %v1239 = vadd.f32 %v758, %v1237
    %v1240 = vtanh.pop %v1239
    %1241 = vst.msk [vmem:[#allocation2] sm:$0x40] %vm592, %v1240
    %v1243 = vrot.slane %v1240, 6
    %v1244 = vsel %vm108, %v1243, 0
    %1246 = vmatprep.subr.mxu0 0.0
    %1247 = vmatpush1.msra.mxu0 %v680
    %1248 = vmatprep.subr.mxu0 0.0
    %1249 = vmatpush1.msra.mxu0 %v681
    %1250 = vmatprep.subr.mxu0 0.0
    %1251 = vmatpush1.msra.mxu0 %v682
    %1252 = vmatprep.subr.mxu0 0.0
    %1253 = vmatpush1.msra.mxu0 %v683
    %1254 = vmatprep.subr.mxu0 0.0
    %1255 = vmatpush1.msra.mxu0 0.0
    %1256 = vmatprep.subr.mxu0 0.0
    %1257 = vmatpush1.msra.mxu0 0.0
    %1258 = vmatprep.subr.mxu0 0.0
    %1259 = vmatpush1.msra.mxu0 0.0
    %1260 = vmatprep.subr.mxu0 0.0
    %1261 = vmatpush1.msra.mxu0 0.0
    %1262 = vmatprep.subr.mxu0 0.0
    %1263 = vmatpush1.msra.mxu0 0.0
    %1264 = vmatprep.subr.mxu0 0.0
    %1265 = vmatpush1.msra.mxu0 0.0
    %1266 = vmatprep.subr.mxu0 0.0
    %1267 = vmatpush1.msra.mxu0 0.0
    %1268 = vmatprep.subr.mxu0 0.0
    %1269 = vmatpush1.msra.mxu0 0.0
    %1270 = vmatprep.subr.mxu0 0.0
    %1271 = vmatpush1.msra.mxu0 0.0
    %1272 = vmatprep.subr.mxu0 0.0
    %1273 = vmatpush1.msra.mxu0 0.0
    %1274 = vmatprep.subr.mxu0 0.0
    %1275 = vmatpush1.msra.mxu0 0.0
    %1276 = vmatprep.subr.mxu0 0.0
    %1277 = vmatpush1.msra.mxu0 0.0
    %1278 = vmatprep.subr.mxu0 0.0
    %1279 = vmatpush1.msra.mxu0 0.0
    %1280 = vmatprep.subr.mxu0 0.0
    %1281 = vmatpush1.msra.mxu0 0.0
    %1282 = vmatprep.subr.mxu0 0.0
    %1283 = vmatpush1.msra.mxu0 0.0
    %1284 = vmatprep.subr.mxu0 0.0
    %1285 = vmatpush1.msra.mxu0 0.0
    %1286 = vmatprep.subr.mxu0 0.0
    %1287 = vmatpush1.msra.mxu0 0.0
    %1288 = vmatprep.subr.mxu0 0.0
    %1289 = vmatpush1.msra.mxu0 0.0
    %1290 = vmatprep.subr.mxu0 0.0
    %1291 = vmatpush1.msra.mxu0 0.0
    %1292 = vmatprep.subr.mxu0 0.0
    %1293 = vmatpush1.msra.mxu0 0.0
    %1294 = vmatprep.subr.mxu0 0.0
    %1295 = vmatpush1.msra.mxu0 0.0
    %1296 = vmatprep.subr.mxu0 0.0
    %1297 = vmatpush1.msra.mxu0 0.0
    %1298 = vmatprep.subr.mxu0 0.0
    %1299 = vmatpush1.msra.mxu0 0.0
    %1300 = vmatprep.subr.mxu0 0.0
    %1301 = vmatpush1.msra.mxu0 0.0
    %1302 = vmatprep.subr.mxu0 0.0
    %1303 = vmatpush1.msra.mxu0 0.0
    %1304 = vmatprep.subr.mxu0 0.0
    %1305 = vmatpush1.msra.mxu0 0.0
    %1306 = vmatprep.subr.mxu0 0.0
    %1307 = vmatpush1.msra.mxu0 0.0
    %1308 = vmatprep.subr.mxu0 0.0
    %1309 = vmatpush1.msra.mxu0 0.0
    %1310 = vmatprep.mubr.f32.mxu0 0.0
    %1311 = vmatmul.mubr.f32.gmra.mrb[0].mxu0 %v1244
    %v1312 = vpop.f32.mrb[0].mxu0
    %v1313 = vadd.f32 0.0, %v1312
    %v1314 = vpop.f32.mrb[0].mxu0
    %1315 = vdwg.mxu0
    %v1317 = vrot.slane %v1313, 1
    %v1319 = vadd.f32 %v758, %v1317
    %v1320 = vtanh.pop %v1319
    %1321 = vst.msk [vmem:[#allocation2] sm:$0x80] %vm673, %v1320
    %v1322 = vld [vmem:[#allocation2] sm:$0xff]
    %v1323 = vlaneseq
    %v1324 = vshrl.u32 %v1323, 7
    %v1325 = vsub.s32 2, %v1324
    %v1326 = vrot.slane %v19, %v1325
    %v1328 = vsel %vm108, %v1322, 0
    %1330 = vmatprep.subr.mxu0 0.0
    %1331 = vmatpush1.msra.mxu0 %v15
    %1332 = vmatprep.subr.mxu0 0.0
    %1333 = vmatpush1.msra.mxu0 %v16
    %1334 = vmatprep.subr.mxu0 0.0
    %1335 = vmatpush1.msra.mxu0 %v17
    %1336 = vmatprep.subr.mxu0 0.0
    %1337 = vmatpush1.msra.mxu0 %v18
    %1338 = vmatprep.subr.mxu0 0.0
    %1339 = vmatpush1.msra.mxu0 0.0
    %1340 = vmatprep.subr.mxu0 0.0
    %1341 = vmatpush1.msra.mxu0 0.0
    %1342 = vmatprep.subr.mxu0 0.0
    %1343 = vmatpush1.msra.mxu0 0.0
    %1344 = vmatprep.subr.mxu0 0.0
    %1345 = vmatpush1.msra.mxu0 0.0
    %1346 = vmatprep.subr.mxu0 0.0
    %1347 = vmatpush1.msra.mxu0 0.0
    %1348 = vmatprep.subr.mxu0 0.0
    %1349 = vmatpush1.msra.mxu0 0.0
    %1350 = vmatprep.subr.mxu0 0.0
    %1351 = vmatpush1.msra.mxu0 0.0
    %1352 = vmatprep.subr.mxu0 0.0
    %1353 = vmatpush1.msra.mxu0 0.0
    %1354 = vmatprep.subr.mxu0 0.0
    %1355 = vmatpush1.msra.mxu0 0.0
    %1356 = vmatprep.subr.mxu0 0.0
    %1357 = vmatpush1.msra.mxu0 0.0
    %1358 = vmatprep.subr.mxu0 0.0
    %1359 = vmatpush1.msra.mxu0 0.0
    %1360 = vmatprep.subr.mxu0 0.0
    %1361 = vmatpush1.msra.mxu0 0.0
    %1362 = vmatprep.subr.mxu0 0.0
    %1363 = vmatpush1.msra.mxu0 0.0
    %1364 = vmatprep.subr.mxu0 0.0
    %1365 = vmatpush1.msra.mxu0 0.0
    %1366 = vmatprep.subr.mxu0 0.0
    %1367 = vmatpush1.msra.mxu0 0.0
    %1368 = vmatprep.subr.mxu0 0.0
    %1369 = vmatpush1.msra.mxu0 0.0
    %1370 = vmatprep.subr.mxu0 0.0
    %1371 = vmatpush1.msra.mxu0 0.0
    %1372 = vmatprep.subr.mxu0 0.0
    %1373 = vmatpush1.msra.mxu0 0.0
    %1374 = vmatprep.subr.mxu0 0.0
    %1375 = vmatpush1.msra.mxu0 0.0
    %1376 = vmatprep.subr.mxu0 0.0
    %1377 = vmatpush1.msra.mxu0 0.0
    %1378 = vmatprep.subr.mxu0 0.0
    %1379 = vmatpush1.msra.mxu0 0.0
    %1380 = vmatprep.subr.mxu0 0.0
    %1381 = vmatpush1.msra.mxu0 0.0
    %1382 = vmatprep.subr.mxu0 0.0
    %1383 = vmatpush1.msra.mxu0 0.0
    %1384 = vmatprep.subr.mxu0 0.0
    %1385 = vmatpush1.msra.mxu0 0.0
    %1386 = vmatprep.subr.mxu0 0.0
    %1387 = vmatpush1.msra.mxu0 0.0
    %1388 = vmatprep.subr.mxu0 0.0
    %1389 = vmatpush1.msra.mxu0 0.0
    %1390 = vmatprep.subr.mxu0 0.0
    %1391 = vmatpush1.msra.mxu0 0.0
    %1392 = vmatprep.subr.mxu0 0.0
    %1393 = vmatpush1.msra.mxu0 0.0
    %1394 = vmatprep.mubr.f32.mxu0 0.0
    %1395 = vmatmul.mubr.f32.gmra.mrb[0].mxu0 %v1328
    %v1396 = vpop.f32.mrb[0].mxu0
    %v1397 = vadd.f32 %v1326, %v1396
    %v1398 = vpop.f32.mrb[0].mxu0
    %1399 = vdwg.mxu0
    %1400 = vmax.xlane.f32.xlu0 %v1397
    %v1401 = vpop.xlane.xlu0 %1400
    %v1402 = vsub.f32 %v1397, %v1401
    %v1403 = vmul.f32 %v1402, 1.442695
    %v1404 = vpow.pop %v1403
    %1405 = vadd.xlane.f32.xlu0 %v1404
    %v1406 = vpop.xlane.xlu0 %1405
    %v1407 = vlog2.pop %v1406
    %v1408 = vmul.f32 %v1407, 0.6931472
    %v1409 = vsub.f32 %v1402, %v1408
    %1410 = vst [vmem:[#allocation3] sm:$0xff] %v1409
    // Predicated region
    $region14: #{rnn_forward_packed.1} parent=1 // pred_check
      _
    $region15: #{rnn_forward_packed.1} parent=1 // pred_check_branch
      %1412 = sbr.rel (0) target = $region17
    $region16: #{rnn_forward_packed.1} parent=1 // pred_region
      %s1414 = ssub.s32 128, 128
      %1415 = vsyncadd [#allocation4], %s1414
      %s1417 = sshll.u32 [#allocation3], 4
      %s1418 = int_to_ptr.vmem [resolvable:$true] %s1417
      %1420 = dma.vmem_to_hbm [thread:$0]  %s1418, 128, %s3, [#allocation4]
    $region17: #{rnn_forward_packed.1} parent=1 // pred_fallthru
      _
    // Predicated region
    $region18: #{rnn_forward_packed.1} parent=1 // pred_check
      _
    $region19: #{rnn_forward_packed.1} parent=1 // pred_check_branch
      %1422 = sbr.rel (0) target = $region21
    $region20: #{rnn_forward_packed.1} parent=1 // pred_region
      %1423 = dma.done [#allocation4], 128
    $region21: #{rnn_forward_packed.1} parent=1 // pred_fallthru
      _
    %1424 = vsyncpa [#allocation4], 1

</llo_original>
